<compile_context>
chip_gen: v7x
topology: tpu7x:2x2x1
jax: 0.10.0
libtpu: 0.0.40
codegen_flags: <defaults>
</compile_context>

<pallas_src>
import math

import jax
import jax.numpy as jnp
from jax.experimental import pallas as pl
from jax.experimental.pallas import tpu as pltpu

N_FREQUENCIES = 10
N_SPACE = 3
EMB_HALF = N_FREQUENCIES * N_SPACE          # 30
EMB_DIM = 2 * EMB_HALF                      # 60
PACK = 32                                   # atoms packed per lane-dense row
PACKED_IN = PACK * (N_SPACE + 1)            # 128  ([x, y, z, 1] per atom)
PACKED_OUT = PACK * EMB_DIM                 # 1920 = 15 * 128 (lane-dense output)


def _sinusoids_kernel(x_ref, w_ref, o_ref):
    # x_ref: (tile, 128), w_ref: (128, 1920), o_ref: (tile, 1920)
    emb = jnp.dot(x_ref[...], w_ref[...], preferred_element_type=jnp.float32)
    # cos is folded in as sin(theta + pi/2) via the phase row of W -> one
    # full-width, unmasked store.
    o_ref[...] = jnp.sin(emb).astype(o_ref.dtype)


def _make_w_aug(dtype=jnp.float32):
    """(4, 60):  sin([x | 1] @ W_aug) == cat(sin(x*f), cos(x*f))."""
    freqs = 2.0 * math.pi * jnp.arange(N_FREQUENCIES, dtype=dtype)            # (10,)
    eye = jnp.eye(N_SPACE, dtype=dtype)                                       # (3, 3)
    # w_half[s, s*F + f] = 2*pi*f, zero elsewhere
    w_half = (eye[:, :, None] * freqs[None, None, :]).reshape(N_SPACE, EMB_HALF)
    w_freq = jnp.concatenate([w_half, w_half], axis=1)                        # (3, 60)
    phase = jnp.concatenate(
        [jnp.zeros((1, EMB_HALF), dtype),
         jnp.full((1, EMB_HALF), 0.5 * math.pi, dtype)], axis=1)              # (1, 60)
    return jnp.concatenate([w_freq, phase], axis=0)                           # (4, 60)


def _make_w_packed(dtype=jnp.float32):
    """(128, 1920) block-diagonal: 32 copies of W_aug, one per packed atom."""
    w_aug = _make_w_aug(dtype)                                                # (4, 60)
    eye = jnp.eye(PACK, dtype=dtype)                                          # (32, 32)
    w = eye[:, None, :, None] * w_aug[None, :, None, :]                       # (32,4,32,60)
    return w.reshape(PACKED_IN, PACKED_OUT)


def _round_up(a, b):
    return ((a + b - 1) // b) * b


def sinusoids_embedding(x, *, tile_rows=256):
    """x: (N, 3) float32 -> (N, 60) float32.

    tile_rows = packed rows per grid step (each packed row holds 32 atoms),
    i.e. 32*tile_rows atoms of input and 32*tile_rows*60 outputs per step.
    """
    assert tile_rows % 8 == 0, "tile_rows must be a multiple of 8"
    n, n_space = x.shape
    assert n_space == N_SPACE
    dtype = x.dtype

    # Augment with a ones column (drives the pi/2 phase for the cos half).
    x_aug = jnp.concatenate([x, jnp.ones((n, 1), dtype)], axis=-1)            # (n, 4)

    # Pad N so the packed-row array tiles evenly; padded rows are all-zero
    # (-> sin(0)=0) and get sliced off at the end.
    rows = _round_up(max(n, 1), PACK) // PACK
    tile = min(tile_rows, _round_up(rows, 8))
    rows_padded = _round_up(rows, tile)
    n_padded = rows_padded * PACK
    if n_padded != n:
        x_aug = jnp.pad(x_aug, ((0, n_padded - n), (0, 0)))

    # Free row-major reshape: 32 atoms per 128-lane row.
    x_packed = x_aug.reshape(rows_padded, PACKED_IN)                          # (R, 128)
    w = _make_w_packed(dtype)                                                 # (128, 1920)

    out_packed = pl.pallas_call(
        _sinusoids_kernel,
        out_shape=jax.ShapeDtypeStruct((rows_padded, PACKED_OUT), dtype),
        grid_spec=pltpu.PrefetchScalarGridSpec(
            num_scalar_prefetch=0,
            grid=(rows_padded // tile,),
            in_specs=[
                pl.BlockSpec((tile, PACKED_IN), lambda i: (i, 0)),
                pl.BlockSpec((PACKED_IN, PACKED_OUT), lambda i: (0, 0)),
            ],
            out_specs=pl.BlockSpec((tile, PACKED_OUT), lambda i: (i, 0)),
        ),
        compiler_params=pltpu.CompilerParams(
            dimension_semantics=("parallel",),
        ),
    )(x_packed, w)

    # Free reshape back to per-atom layout, drop padding.
    return out_packed.reshape(n_padded, EMB_DIM)[:n]


def sinusoids_embedding_ref(x):
    """Plain-JAX reference mirroring the PyTorch forward."""
    freqs = 2.0 * math.pi * jnp.arange(N_FREQUENCIES, dtype=x.dtype)
    emb = x[:, :, None] * freqs[None, None, :]
    emb = emb.reshape(-1, N_FREQUENCIES * N_SPACE)
    return jnp.concatenate([jnp.sin(emb), jnp.cos(emb)], axis=-1)


if __name__ == "__main__":
    key = jax.random.PRNGKey(0)
    k1, k2 = jax.random.split(key)

    # Small ragged N: exercises padding + single-step grid.
    x1 = jax.random.uniform(k1, (50, N_SPACE), dtype=jnp.float32)
    out1 = jax.block_until_ready(sinusoids_embedding(x1))
    ref1 = sinusoids_embedding_ref(x1)
    assert out1.shape == (50, EMB_DIM) and out1.dtype == jnp.float32
    assert jnp.allclose(out1, ref1, atol=1e-4, rtol=1e-4), float(
        jnp.max(jnp.abs(out1 - ref1)))

    # Larger ragged N with a small tile to force a multi-step grid.
    x2 = jax.random.uniform(k2, (600, N_SPACE), dtype=jnp.float32)
    out2 = jax.block_until_ready(sinusoids_embedding(x2, tile_rows=8))
    ref2 = sinusoids_embedding_ref(x2)
    assert out2.shape == (600, EMB_DIM)
    assert jnp.allclose(out2, ref2, atol=1e-4, rtol=1e-4), float(
        jnp.max(jnp.abs(out2 - ref2)))

    print("KERNEL_OK")
</pallas_src>

<mosaic_0001>
module attributes {stable_mosaic.version = 11 : i64} {
  func.func @_sinusoids_kernel(%arg0: i32, %arg1: memref<8x128xf32, #tpu.memory_space<vmem>>, %arg2: memref<128x1920xf32, #tpu.memory_space<vmem>>, %arg3: memref<8x1920xf32, #tpu.memory_space<vmem>>) attributes {dimension_semantics = [#tpu.dimension_semantics<parallel>], iteration_bounds = array<i64: 1>, scalar_prefetch = 0 : i64, scratch_operands = 0 : i64, tpu.core_type = #tpu.core_type<tc>, window_params = [{transform_indices = @transform_0, window_bounds = array<i64: 8, 128>}, {pipeline_mode = #tpu.pipeline_mode<synchronous>, transform_indices = @transform_1, window_bounds = array<i64: 128, 1920>}, {transform_indices = @transform_2, window_bounds = array<i64: 8, 1920>}]} {
    %c0 = arith.constant 0 : index
    %c0_0 = arith.constant 0 : index
    %0 = vector.load %arg1[%c0, %c0_0] : memref<8x128xf32, #tpu.memory_space<vmem>>, vector<8x128xf32>
    %c0_1 = arith.constant 0 : index
    %c0_2 = arith.constant 0 : index
    %1 = vector.load %arg2[%c0_1, %c0_2] : memref<128x1920xf32, #tpu.memory_space<vmem>>, vector<128x1920xf32>
    %cst = arith.constant dense<0.000000e+00> : vector<8x1920xf32>
    %2 = tpu.matmul %0, %1, %cst {dimension_numbers = #tpu.dot_dimension_numbers<[1], [0], [0], [1], [0, 0, 1, 1], [], []>} : vector<8x128xf32>, vector<128x1920xf32>, vector<8x1920xf32> -> vector<8x1920xf32>
    %3 = math.sin %2 : vector<8x1920xf32>
    %c0_3 = arith.constant 0 : index
    %c0_4 = arith.constant 0 : index
    %4 = vector.load %arg3[%c0_3, %c0_4] : memref<8x1920xf32, #tpu.memory_space<vmem>>, vector<8x1920xf32>
    tpu.vector_store %arg3[%c0_3, %c0_4], %3 {strides = array<i32>} : memref<8x1920xf32, #tpu.memory_space<vmem>>, vector<8x1920xf32>,
    return
  }
  func.func @transform_0(%arg0: i32) -> (i32, i32) {
    %c0_i32 = arith.constant 0 : i32
    %c0_i32_0 = arith.constant 0 : i32
    return %arg0, %c0_i32 : i32, i32
  }
  func.func @transform_1(%arg0: i32) -> (i32, i32) {
    %c0_i32 = arith.constant 0 : i32
    %c0_i32_0 = arith.constant 0 : i32
    %c0_i32_1 = arith.constant 0 : i32
    return %c0_i32, %c0_i32_0 : i32, i32
  }
  func.func @transform_2(%arg0: i32) -> (i32, i32) {
    %c0_i32 = arith.constant 0 : i32
    %c0_i32_0 = arith.constant 0 : i32
    return %arg0, %c0_i32 : i32, i32
  }
}

</mosaic_0001>

<llo_original>
// kernel: tpu_custom_call.1
$region0: #{tpu_custom_call.1}
  #allocation0 [shape = 'u32[]', space=smem, size = 0x4, offset = 0x4, fixed_abs, tag = 'smem constant byte address 0x4 - core index']
  #allocation1 [shape = 'u32[144,128]{1,0:T(1,128)}', space=vmem, size = 0x12000, scoped, tag = 'internal scratch']
  %s0 = inlined_call_operand.hbm [shape: f32[8,128], index: 0, kind: input, shape index: {}]
  %s1 = inlined_call_operand.hbm [shape: f32[128,1920], index: 1, kind: input, shape index: {}]
  %s2 = inlined_call_operand.hbm [shape: f32[8,1920], index: 2, kind: output, shape index: {}]
  %s3 = sld [smem:[#allocation0]]
  $region26: #{tpu_custom_call.1} parent=0
    _
  %s5 = ssub.s32 1, %s3
  %s6 = scalar_select 0, %s5, %s3
  $region1: #{tpu_custom_call.1} parent=0
    #allocation2 [shape = 'u8[4096]{0}', space=vmem, size = 0x1000, scoped, tag = 'input window, operand 0, single buffered']
    #allocation3 [shape = 's32[1]{0}', space=sflag, size = 0x4, scoped, tag = 'scoped memory for tpu_custom_call.1']
    #allocation4 [shape = 's32[1]{0}', space=sflag, size = 0x4, scoped, tag = 'scoped memory for tpu_custom_call.1']
    #allocation5 [shape = 'u8[983040]{0}', space=vmem, size = 0xf0000, scoped, tag = 'input window, operand 1, single buffered']
    #allocation6 [shape = 's32[1]{0}', space=sflag, size = 0x4, scoped, tag = 'scoped memory for tpu_custom_call.1']
    #allocation7 [shape = 'u8[61440]{0}', space=vmem, size = 0xf000, scoped, tag = 'output window, operand 0, single buffered']
    %7 = vsyncpa [#allocation3], 0
    %8 = vsyncpa [#allocation6], 0
    %9 = vsyncpa [#allocation4], 0
    // Predicated region
    $region2: #{tpu_custom_call.1} parent=1 // pred_check
      _
    $region3: #{tpu_custom_call.1} parent=1 // pred_check_branch
      %11 = sbr.rel (0) target = $region5
    $region4: #{tpu_custom_call.1} parent=1 // pred_region
      %s13 = ssub.s32 128, 128
      %14 = vsyncadd [#allocation3], %s13
      %s16 = sshll.u32 [#allocation2], 4
      %s17 = int_to_ptr.vmem [resolvable:$true] %s16
      %19 = dma.hbm_to_vmem [thread:$0]  %s0, 128, %s17, [#allocation3]
    $region5: #{tpu_custom_call.1} parent=1 // pred_fallthru
      _
    // Predicated region
    $region6: #{tpu_custom_call.1} parent=1 // pred_check
      _
    $region7: #{tpu_custom_call.1} parent=1 // pred_check_branch
      %21 = sbr.rel (0) target = $region9
    $region8: #{tpu_custom_call.1} parent=1 // pred_region
      %s23 = ssub.s32 30720, 30720
      %24 = vsyncadd [#allocation6], %s23
      %s25 = sshll.u32 [#allocation5], 4
      %s26 = int_to_ptr.vmem [resolvable:$true] %s25
      %31 = dma.hbm_to_vmem [thread:$0]  %s1, 30720, %s26, [#allocation6], 1920, 1920, 120
    $region9: #{tpu_custom_call.1} parent=1 // pred_fallthru
      _
    // Predicated region
    $region10: #{tpu_custom_call.1} parent=1 // pred_check
      _
    $region11: #{tpu_custom_call.1} parent=1 // pred_check_branch
      %33 = sbr.rel (0) target = $region13
    $region12: #{tpu_custom_call.1} parent=1 // pred_region
      %34 = dma.done [#allocation3], 128
    $region13: #{tpu_custom_call.1} parent=1 // pred_fallthru
      _
    // Predicated region
    $region14: #{tpu_custom_call.1} parent=1 // pred_check
      _
    $region15: #{tpu_custom_call.1} parent=1 // pred_check_branch
      %36 = sbr.rel (0) target = $region17
    $region16: #{tpu_custom_call.1} parent=1 // pred_region
      %37 = dma.done [#allocation6], 30720
    $region17: #{tpu_custom_call.1} parent=1 // pred_fallthru
      _
    %v38 = vld [vmem:[#allocation2] sm:$0xff]
    %v39 = vld [vmem:[#allocation5] sm:$0xff]
    %v40 = vld [vmem:[#allocation5 + $0x8] sm:$0xff]
    %v41 = vld [vmem:[#allocation5 + $0x10] sm:$0xff]
    %v42 = vld [vmem:[#allocation5 + $0x18] sm:$0xff]
    %v43 = vld [vmem:[#allocation5 + $0x20] sm:$0xff]
    %v44 = vld [vmem:[#allocation5 + $0x28] sm:$0xff]
    %v45 = vld [vmem:[#allocation5 + $0x30] sm:$0xff]
    %v46 = vld [vmem:[#allocation5 + $0x38] sm:$0xff]
    %v47 = vld [vmem:[#allocation5 + $0x40] sm:$0xff]
    %v48 = vld [vmem:[#allocation5 + $0x48] sm:$0xff]
    %v49 = vld [vmem:[#allocation5 + $0x50] sm:$0xff]
    %v50 = vld [vmem:[#allocation5 + $0x58] sm:$0xff]
    %v51 = vld [vmem:[#allocation5 + $0x60] sm:$0xff]
    %v52 = vld [vmem:[#allocation5 + $0x68] sm:$0xff]
    %v53 = vld [vmem:[#allocation5 + $0x70] sm:$0xff]
    %v54 = vld [vmem:[#allocation5 + $0x78] sm:$0xff]
    %v55 = vld [vmem:[#allocation5 + $0x80] sm:$0xff]
    %v56 = vld [vmem:[#allocation5 + $0x88] sm:$0xff]
    %v57 = vld [vmem:[#allocation5 + $0x90] sm:$0xff]
    %v58 = vld [vmem:[#allocation5 + $0x98] sm:$0xff]
    %v59 = vld [vmem:[#allocation5 + $0xa0] sm:$0xff]
    %v60 = vld [vmem:[#allocation5 + $0xa8] sm:$0xff]
    %v61 = vld [vmem:[#allocation5 + $0xb0] sm:$0xff]
    %v62 = vld [vmem:[#allocation5 + $0xb8] sm:$0xff]
    %v63 = vld [vmem:[#allocation5 + $0xc0] sm:$0xff]
    %v64 = vld [vmem:[#allocation5 + $0xc8] sm:$0xff]
    %v65 = vld [vmem:[#allocation5 + $0xd0] sm:$0xff]
    %v66 = vld [vmem:[#allocation5 + $0xd8] sm:$0xff]
    %v67 = vld [vmem:[#allocation5 + $0xe0] sm:$0xff]
    %v68 = vld [vmem:[#allocation5 + $0xe8] sm:$0xff]
    %v69 = vld [vmem:[#allocation5 + $0xf0] sm:$0xff]
    %v70 = vld [vmem:[#allocation5 + $0xf8] sm:$0xff]
    %v71 = vld [vmem:[#allocation5 + $0x100] sm:$0xff]
    %v72 = vld [vmem:[#allocation5 + $0x108] sm:$0xff]
    %v73 = vld [vmem:[#allocation5 + $0x110] sm:$0xff]
    %v74 = vld [vmem:[#allocation5 + $0x118] sm:$0xff]
    %v75 = vld [vmem:[#allocation5 + $0x120] sm:$0xff]
    %v76 = vld [vmem:[#allocation5 + $0x128] sm:$0xff]
    %v77 = vld [vmem:[#allocation5 + $0x130] sm:$0xff]
    %v78 = vld [vmem:[#allocation5 + $0x138] sm:$0xff]
    %v79 = vld [vmem:[#allocation5 + $0x140] sm:$0xff]
    %v80 = vld [vmem:[#allocation5 + $0x148] sm:$0xff]
    %v81 = vld [vmem:[#allocation5 + $0x150] sm:$0xff]
    %v82 = vld [vmem:[#allocation5 + $0x158] sm:$0xff]
    %v83 = vld [vmem:[#allocation5 + $0x160] sm:$0xff]
    %v84 = vld [vmem:[#allocation5 + $0x168] sm:$0xff]
    %v85 = vld [vmem:[#allocation5 + $0x170] sm:$0xff]
    %v86 = vld [vmem:[#allocation5 + $0x178] sm:$0xff]
    %v87 = vld [vmem:[#allocation5 + $0x180] sm:$0xff]
    %v88 = vld [vmem:[#allocation5 + $0x188] sm:$0xff]
    %v89 = vld [vmem:[#allocation5 + $0x190] sm:$0xff]
    %v90 = vld [vmem:[#allocation5 + $0x198] sm:$0xff]
    %v91 = vld [vmem:[#allocation5 + $0x1a0] sm:$0xff]
    %v92 = vld [vmem:[#allocation5 + $0x1a8] sm:$0xff]
    %v93 = vld [vmem:[#allocation5 + $0x1b0] sm:$0xff]
    %v94 = vld [vmem:[#allocation5 + $0x1b8] sm:$0xff]
    %v95 = vld [vmem:[#allocation5 + $0x1c0] sm:$0xff]
    %v96 = vld [vmem:[#allocation5 + $0x1c8] sm:$0xff]
    %v97 = vld [vmem:[#allocation5 + $0x1d0] sm:$0xff]
    %v98 = vld [vmem:[#allocation5 + $0x1d8] sm:$0xff]
    %v99 = vld [vmem:[#allocation5 + $0x1e0] sm:$0xff]
    %v100 = vld [vmem:[#allocation5 + $0x1e8] sm:$0xff]
    %v101 = vld [vmem:[#allocation5 + $0x1f0] sm:$0xff]
    %v102 = vld [vmem:[#allocation5 + $0x1f8] sm:$0xff]
    %v103 = vld [vmem:[#allocation5 + $0x200] sm:$0xff]
    %v104 = vld [vmem:[#allocation5 + $0x208] sm:$0xff]
    %v105 = vld [vmem:[#allocation5 + $0x210] sm:$0xff]
    %v106 = vld [vmem:[#allocation5 + $0x218] sm:$0xff]
    %v107 = vld [vmem:[#allocation5 + $0x220] sm:$0xff]
    %v108 = vld [vmem:[#allocation5 + $0x228] sm:$0xff]
    %v109 = vld [vmem:[#allocation5 + $0x230] sm:$0xff]
    %v110 = vld [vmem:[#allocation5 + $0x238] sm:$0xff]
    %v111 = vld [vmem:[#allocation5 + $0x240] sm:$0xff]
    %v112 = vld [vmem:[#allocation5 + $0x248] sm:$0xff]
    %v113 = vld [vmem:[#allocation5 + $0x250] sm:$0xff]
    %v114 = vld [vmem:[#allocation5 + $0x258] sm:$0xff]
    %v115 = vld [vmem:[#allocation5 + $0x260] sm:$0xff]
    %v116 = vld [vmem:[#allocation5 + $0x268] sm:$0xff]
    %v117 = vld [vmem:[#allocation5 + $0x270] sm:$0xff]
    %v118 = vld [vmem:[#allocation5 + $0x278] sm:$0xff]
    %v119 = vld [vmem:[#allocation5 + $0x280] sm:$0xff]
    %v120 = vld [vmem:[#allocation5 + $0x288] sm:$0xff]
    %v121 = vld [vmem:[#allocation5 + $0x290] sm:$0xff]
    %v122 = vld [vmem:[#allocation5 + $0x298] sm:$0xff]
    %v123 = vld [vmem:[#allocation5 + $0x2a0] sm:$0xff]
    %v124 = vld [vmem:[#allocation5 + $0x2a8] sm:$0xff]
    %v125 = vld [vmem:[#allocation5 + $0x2b0] sm:$0xff]
    %v126 = vld [vmem:[#allocation5 + $0x2b8] sm:$0xff]
    %v127 = vld [vmem:[#allocation5 + $0x2c0] sm:$0xff]
    %v128 = vld [vmem:[#allocation5 + $0x2c8] sm:$0xff]
    %v129 = vld [vmem:[#allocation5 + $0x2d0] sm:$0xff]
    %v130 = vld [vmem:[#allocation5 + $0x2d8] sm:$0xff]
    %v131 = vld [vmem:[#allocation5 + $0x2e0] sm:$0xff]
    %v132 = vld [vmem:[#allocation5 + $0x2e8] sm:$0xff]
    %v133 = vld [vmem:[#allocation5 + $0x2f0] sm:$0xff]
    %v134 = vld [vmem:[#allocation5 + $0x2f8] sm:$0xff]
    %v135 = vld [vmem:[#allocation5 + $0x300] sm:$0xff]
    %v136 = vld [vmem:[#allocation5 + $0x308] sm:$0xff]
    %v137 = vld [vmem:[#allocation5 + $0x310] sm:$0xff]
    %v138 = vld [vmem:[#allocation5 + $0x318] sm:$0xff]
    %v139 = vld [vmem:[#allocation5 + $0x320] sm:$0xff]
    %v140 = vld [vmem:[#allocation5 + $0x328] sm:$0xff]
    %v141 = vld [vmem:[#allocation5 + $0x330] sm:$0xff]
    %v142 = vld [vmem:[#allocation5 + $0x338] sm:$0xff]
    %v143 = vld [vmem:[#allocation5 + $0x340] sm:$0xff]
    %v144 = vld [vmem:[#allocation5 + $0x348] sm:$0xff]
    %v145 = vld [vmem:[#allocation5 + $0x350] sm:$0xff]
    %v146 = vld [vmem:[#allocation5 + $0x358] sm:$0xff]
    %v147 = vld [vmem:[#allocation5 + $0x360] sm:$0xff]
    %v148 = vld [vmem:[#allocation5 + $0x368] sm:$0xff]
    %v149 = vld [vmem:[#allocation5 + $0x370] sm:$0xff]
    %v150 = vld [vmem:[#allocation5 + $0x378] sm:$0xff]
    %v151 = vld [vmem:[#allocation5 + $0x380] sm:$0xff]
    %v152 = vld [vmem:[#allocation5 + $0x388] sm:$0xff]
    %v153 = vld [vmem:[#allocation5 + $0x390] sm:$0xff]
    %v154 = vld [vmem:[#allocation5 + $0x398] sm:$0xff]
    %v155 = vld [vmem:[#allocation5 + $0x3a0] sm:$0xff]
    %v156 = vld [vmem:[#allocation5 + $0x3a8] sm:$0xff]
    %v157 = vld [vmem:[#allocation5 + $0x3b0] sm:$0xff]
    %v158 = vld [vmem:[#allocation5 + $0x3b8] sm:$0xff]
    %v159 = vld [vmem:[#allocation5 + $0x3c0] sm:$0xff]
    %v160 = vld [vmem:[#allocation5 + $0x3c8] sm:$0xff]
    %v161 = vld [vmem:[#allocation5 + $0x3d0] sm:$0xff]
    %v162 = vld [vmem:[#allocation5 + $0x3d8] sm:$0xff]
    %v163 = vld [vmem:[#allocation5 + $0x3e0] sm:$0xff]
    %v164 = vld [vmem:[#allocation5 + $0x3e8] sm:$0xff]
    %v165 = vld [vmem:[#allocation5 + $0x3f0] sm:$0xff]
    %v166 = vld [vmem:[#allocation5 + $0x3f8] sm:$0xff]
    %v167 = vld [vmem:[#allocation5 + $0x400] sm:$0xff]
    %v168 = vld [vmem:[#allocation5 + $0x408] sm:$0xff]
    %v169 = vld [vmem:[#allocation5 + $0x410] sm:$0xff]
    %v170 = vld [vmem:[#allocation5 + $0x418] sm:$0xff]
    %v171 = vld [vmem:[#allocation5 + $0x420] sm:$0xff]
    %v172 = vld [vmem:[#allocation5 + $0x428] sm:$0xff]
    %v173 = vld [vmem:[#allocation5 + $0x430] sm:$0xff]
    %v174 = vld [vmem:[#allocation5 + $0x438] sm:$0xff]
    %v175 = vld [vmem:[#allocation5 + $0x440] sm:$0xff]
    %v176 = vld [vmem:[#allocation5 + $0x448] sm:$0xff]
    %v177 = vld [vmem:[#allocation5 + $0x450] sm:$0xff]
    %v178 = vld [vmem:[#allocation5 + $0x458] sm:$0xff]
    %v179 = vld [vmem:[#allocation5 + $0x460] sm:$0xff]
    %v180 = vld [vmem:[#allocation5 + $0x468] sm:$0xff]
    %v181 = vld [vmem:[#allocation5 + $0x470] sm:$0xff]
    %v182 = vld [vmem:[#allocation5 + $0x478] sm:$0xff]
    %v183 = vld [vmem:[#allocation5 + $0x480] sm:$0xff]
    %v184 = vld [vmem:[#allocation5 + $0x488] sm:$0xff]
    %v185 = vld [vmem:[#allocation5 + $0x490] sm:$0xff]
    %v186 = vld [vmem:[#allocation5 + $0x498] sm:$0xff]
    %v187 = vld [vmem:[#allocation5 + $0x4a0] sm:$0xff]
    %v188 = vld [vmem:[#allocation5 + $0x4a8] sm:$0xff]
    %v189 = vld [vmem:[#allocation5 + $0x4b0] sm:$0xff]
    %v190 = vld [vmem:[#allocation5 + $0x4b8] sm:$0xff]
    %v191 = vld [vmem:[#allocation5 + $0x4c0] sm:$0xff]
    %v192 = vld [vmem:[#allocation5 + $0x4c8] sm:$0xff]
    %v193 = vld [vmem:[#allocation5 + $0x4d0] sm:$0xff]
    %v194 = vld [vmem:[#allocation5 + $0x4d8] sm:$0xff]
    %v195 = vld [vmem:[#allocation5 + $0x4e0] sm:$0xff]
    %v196 = vld [vmem:[#allocation5 + $0x4e8] sm:$0xff]
    %v197 = vld [vmem:[#allocation5 + $0x4f0] sm:$0xff]
    %v198 = vld [vmem:[#allocation5 + $0x4f8] sm:$0xff]
    %v199 = vld [vmem:[#allocation5 + $0x500] sm:$0xff]
    %v200 = vld [vmem:[#allocation5 + $0x508] sm:$0xff]
    %v201 = vld [vmem:[#allocation5 + $0x510] sm:$0xff]
    %v202 = vld [vmem:[#allocation5 + $0x518] sm:$0xff]
    %v203 = vld [vmem:[#allocation5 + $0x520] sm:$0xff]
    %v204 = vld [vmem:[#allocation5 + $0x528] sm:$0xff]
    %v205 = vld [vmem:[#allocation5 + $0x530] sm:$0xff]
    %v206 = vld [vmem:[#allocation5 + $0x538] sm:$0xff]
    %v207 = vld [vmem:[#allocation5 + $0x540] sm:$0xff]
    %v208 = vld [vmem:[#allocation5 + $0x548] sm:$0xff]
    %v209 = vld [vmem:[#allocation5 + $0x550] sm:$0xff]
    %v210 = vld [vmem:[#allocation5 + $0x558] sm:$0xff]
    %v211 = vld [vmem:[#allocation5 + $0x560] sm:$0xff]
    %v212 = vld [vmem:[#allocation5 + $0x568] sm:$0xff]
    %v213 = vld [vmem:[#allocation5 + $0x570] sm:$0xff]
    %v214 = vld [vmem:[#allocation5 + $0x578] sm:$0xff]
    %v215 = vld [vmem:[#allocation5 + $0x580] sm:$0xff]
    %v216 = vld [vmem:[#allocation5 + $0x588] sm:$0xff]
    %v217 = vld [vmem:[#allocation5 + $0x590] sm:$0xff]
    %v218 = vld [vmem:[#allocation5 + $0x598] sm:$0xff]
    %v219 = vld [vmem:[#allocation5 + $0x5a0] sm:$0xff]
    %v220 = vld [vmem:[#allocation5 + $0x5a8] sm:$0xff]
    %v221 = vld [vmem:[#allocation5 + $0x5b0] sm:$0xff]
    %v222 = vld [vmem:[#allocation5 + $0x5b8] sm:$0xff]
    %v223 = vld [vmem:[#allocation5 + $0x5c0] sm:$0xff]
    %v224 = vld [vmem:[#allocation5 + $0x5c8] sm:$0xff]
    %v225 = vld [vmem:[#allocation5 + $0x5d0] sm:$0xff]
    %v226 = vld [vmem:[#allocation5 + $0x5d8] sm:$0xff]
    %v227 = vld [vmem:[#allocation5 + $0x5e0] sm:$0xff]
    %v228 = vld [vmem:[#allocation5 + $0x5e8] sm:$0xff]
    %v229 = vld [vmem:[#allocation5 + $0x5f0] sm:$0xff]
    %v230 = vld [vmem:[#allocation5 + $0x5f8] sm:$0xff]
    %v231 = vld [vmem:[#allocation5 + $0x600] sm:$0xff]
    %v232 = vld [vmem:[#allocation5 + $0x608] sm:$0xff]
    %v233 = vld [vmem:[#allocation5 + $0x610] sm:$0xff]
    %v234 = vld [vmem:[#allocation5 + $0x618] sm:$0xff]
    %v235 = vld [vmem:[#allocation5 + $0x620] sm:$0xff]
    %v236 = vld [vmem:[#allocation5 + $0x628] sm:$0xff]
    %v237 = vld [vmem:[#allocation5 + $0x630] sm:$0xff]
    %v238 = vld [vmem:[#allocation5 + $0x638] sm:$0xff]
    %v239 = vld [vmem:[#allocation5 + $0x640] sm:$0xff]
    %v240 = vld [vmem:[#allocation5 + $0x648] sm:$0xff]
    %v241 = vld [vmem:[#allocation5 + $0x650] sm:$0xff]
    %v242 = vld [vmem:[#allocation5 + $0x658] sm:$0xff]
    %v243 = vld [vmem:[#allocation5 + $0x660] sm:$0xff]
    %v244 = vld [vmem:[#allocation5 + $0x668] sm:$0xff]
    %v245 = vld [vmem:[#allocation5 + $0x670] sm:$0xff]
    %v246 = vld [vmem:[#allocation5 + $0x678] sm:$0xff]
    %v247 = vld [vmem:[#allocation5 + $0x680] sm:$0xff]
    %v248 = vld [vmem:[#allocation5 + $0x688] sm:$0xff]
    %v249 = vld [vmem:[#allocation5 + $0x690] sm:$0xff]
    %v250 = vld [vmem:[#allocation5 + $0x698] sm:$0xff]
    %v251 = vld [vmem:[#allocation5 + $0x6a0] sm:$0xff]
    %v252 = vld [vmem:[#allocation5 + $0x6a8] sm:$0xff]
    %v253 = vld [vmem:[#allocation5 + $0x6b0] sm:$0xff]
    %v254 = vld [vmem:[#allocation5 + $0x6b8] sm:$0xff]
    %v255 = vld [vmem:[#allocation5 + $0x6c0] sm:$0xff]
    %v256 = vld [vmem:[#allocation5 + $0x6c8] sm:$0xff]
    %v257 = vld [vmem:[#allocation5 + $0x6d0] sm:$0xff]
    %v258 = vld [vmem:[#allocation5 + $0x6d8] sm:$0xff]
    %v259 = vld [vmem:[#allocation5 + $0x6e0] sm:$0xff]
    %v260 = vld [vmem:[#allocation5 + $0x6e8] sm:$0xff]
    %v261 = vld [vmem:[#allocation5 + $0x6f0] sm:$0xff]
    %v262 = vld [vmem:[#allocation5 + $0x6f8] sm:$0xff]
    %v263 = vld [vmem:[#allocation5 + $0x700] sm:$0xff]
    %v264 = vld [vmem:[#allocation5 + $0x708] sm:$0xff]
    %v265 = vld [vmem:[#allocation5 + $0x710] sm:$0xff]
    %v266 = vld [vmem:[#allocation5 + $0x718] sm:$0xff]
    %v267 = vld [vmem:[#allocation5 + $0x720] sm:$0xff]
    %v268 = vld [vmem:[#allocation5 + $0x728] sm:$0xff]
    %v269 = vld [vmem:[#allocation5 + $0x730] sm:$0xff]
    %v270 = vld [vmem:[#allocation5 + $0x738] sm:$0xff]
    %v271 = vld [vmem:[#allocation5 + $0x740] sm:$0xff]
    %v272 = vld [vmem:[#allocation5 + $0x748] sm:$0xff]
    %v273 = vld [vmem:[#allocation5 + $0x750] sm:$0xff]
    %v274 = vld [vmem:[#allocation5 + $0x758] sm:$0xff]
    %v275 = vld [vmem:[#allocation5 + $0x760] sm:$0xff]
    %v276 = vld [vmem:[#allocation5 + $0x768] sm:$0xff]
    %v277 = vld [vmem:[#allocation5 + $0x770] sm:$0xff]
    %v278 = vld [vmem:[#allocation5 + $0x778] sm:$0xff]
    %279 = vmatprep.subr.mxu0 %v40
    %280 = vmatpush1.msra.mxu0 %v39
    %281 = vmatprep.subr.mxu0 %v55
    %282 = vmatpush1.msra.mxu0 %v54
    %283 = vmatprep.subr.mxu0 %v70
    %284 = vmatpush1.msra.mxu0 %v69
    %285 = vmatprep.subr.mxu0 %v85
    %286 = vmatpush1.msra.mxu0 %v84
    %287 = vmatprep.subr.mxu0 %v100
    %288 = vmatpush1.msra.mxu0 %v99
    %289 = vmatprep.subr.mxu0 %v115
    %290 = vmatpush1.msra.mxu0 %v114
    %291 = vmatprep.subr.mxu0 %v130
    %292 = vmatpush1.msra.mxu0 %v129
    %293 = vmatprep.subr.mxu0 %v145
    %294 = vmatpush1.msra.mxu0 %v144
    %295 = vmatprep.subr.mxu0 %v160
    %296 = vmatpush1.msra.mxu0 %v159
    %297 = vmatprep.subr.mxu0 %v175
    %298 = vmatpush1.msra.mxu0 %v174
    %299 = vmatprep.subr.mxu0 %v190
    %300 = vmatpush1.msra.mxu0 %v189
    %301 = vmatprep.subr.mxu0 %v205
    %302 = vmatpush1.msra.mxu0 %v204
    %303 = vmatprep.subr.mxu0 %v220
    %304 = vmatpush1.msra.mxu0 %v219
    %305 = vmatprep.subr.mxu0 %v235
    %306 = vmatpush1.msra.mxu0 %v234
    %307 = vmatprep.subr.mxu0 %v250
    %308 = vmatpush1.msra.mxu0 %v249
    %309 = vmatprep.subr.mxu0 %v265
    %310 = vmatpush1.msra.mxu0 %v264
    %311 = vmatprep.subr.mxu0 0.0
    %312 = vmatpush1.msra.mxu0 0.0
    %313 = vmatprep.subr.mxu0 0.0
    %314 = vmatpush1.msra.mxu0 0.0
    %315 = vmatprep.subr.mxu0 0.0
    %316 = vmatpush1.msra.mxu0 0.0
    %317 = vmatprep.subr.mxu0 0.0
    %318 = vmatpush1.msra.mxu0 0.0
    %319 = vmatprep.subr.mxu0 0.0
    %320 = vmatpush1.msra.mxu0 0.0
    %321 = vmatprep.subr.mxu0 0.0
    %322 = vmatpush1.msra.mxu0 0.0
    %323 = vmatprep.subr.mxu0 0.0
    %324 = vmatpush1.msra.mxu0 0.0
    %325 = vmatprep.subr.mxu0 0.0
    %326 = vmatpush1.msra.mxu0 0.0
    %327 = vmatprep.subr.mxu0 0.0
    %328 = vmatpush1.msra.mxu0 0.0
    %329 = vmatprep.subr.mxu0 0.0
    %330 = vmatpush1.msra.mxu0 0.0
    %331 = vmatprep.subr.mxu0 0.0
    %332 = vmatpush1.msra.mxu0 0.0
    %333 = vmatprep.subr.mxu0 0.0
    %334 = vmatpush1.msra.mxu0 0.0
    %335 = vmatprep.subr.mxu0 0.0
    %336 = vmatpush1.msra.mxu0 0.0
    %337 = vmatprep.subr.mxu0 0.0
    %338 = vmatpush1.msra.mxu0 0.0
    %339 = vmatprep.subr.mxu0 0.0
    %340 = vmatpush1.msra.mxu0 0.0
    %341 = vmatprep.subr.mxu0 0.0
    %342 = vmatpush1.msra.mxu0 0.0
    %343 = vmatprep.mubr.f32.mxu0 0.0
    %344 = vmatmul.mubr.f32.gmra.mrb[0].mxu0 %v38
    %v345 = vpop.f32.mrb[0].mxu0
    %v346 = vadd.f32 0.0, %v345
    %v347 = vpop.f32.mrb[0].mxu0
    %v348 = vadd.f32 0.0, %v347
    %349 = vdwg.mxu0
    %350 = vmatprep.subr.mxu0 %v42
    %351 = vmatpush1.msra.mxu0 %v41
    %352 = vmatprep.subr.mxu0 %v57
    %353 = vmatpush1.msra.mxu0 %v56
    %354 = vmatprep.subr.mxu0 %v72
    %355 = vmatpush1.msra.mxu0 %v71
    %356 = vmatprep.subr.mxu0 %v87
    %357 = vmatpush1.msra.mxu0 %v86
    %358 = vmatprep.subr.mxu0 %v102
    %359 = vmatpush1.msra.mxu0 %v101
    %360 = vmatprep.subr.mxu0 %v117
    %361 = vmatpush1.msra.mxu0 %v116
    %362 = vmatprep.subr.mxu0 %v132
    %363 = vmatpush1.msra.mxu0 %v131
    %364 = vmatprep.subr.mxu0 %v147
    %365 = vmatpush1.msra.mxu0 %v146
    %366 = vmatprep.subr.mxu0 %v162
    %367 = vmatpush1.msra.mxu0 %v161
    %368 = vmatprep.subr.mxu0 %v177
    %369 = vmatpush1.msra.mxu0 %v176
    %370 = vmatprep.subr.mxu0 %v192
    %371 = vmatpush1.msra.mxu0 %v191
    %372 = vmatprep.subr.mxu0 %v207
    %373 = vmatpush1.msra.mxu0 %v206
    %374 = vmatprep.subr.mxu0 %v222
    %375 = vmatpush1.msra.mxu0 %v221
    %376 = vmatprep.subr.mxu0 %v237
    %377 = vmatpush1.msra.mxu0 %v236
    %378 = vmatprep.subr.mxu0 %v252
    %379 = vmatpush1.msra.mxu0 %v251
    %380 = vmatprep.subr.mxu0 %v267
    %381 = vmatpush1.msra.mxu0 %v266
    %382 = vmatprep.subr.mxu0 0.0
    %383 = vmatpush1.msra.mxu0 0.0
    %384 = vmatprep.subr.mxu0 0.0
    %385 = vmatpush1.msra.mxu0 0.0
    %386 = vmatprep.subr.mxu0 0.0
    %387 = vmatpush1.msra.mxu0 0.0
    %388 = vmatprep.subr.mxu0 0.0
    %389 = vmatpush1.msra.mxu0 0.0
    %390 = vmatprep.subr.mxu0 0.0
    %391 = vmatpush1.msra.mxu0 0.0
    %392 = vmatprep.subr.mxu0 0.0
    %393 = vmatpush1.msra.mxu0 0.0
    %394 = vmatprep.subr.mxu0 0.0
    %395 = vmatpush1.msra.mxu0 0.0
    %396 = vmatprep.subr.mxu0 0.0
    %397 = vmatpush1.msra.mxu0 0.0
    %398 = vmatprep.subr.mxu0 0.0
    %399 = vmatpush1.msra.mxu0 0.0
    %400 = vmatprep.subr.mxu0 0.0
    %401 = vmatpush1.msra.mxu0 0.0
    %402 = vmatprep.subr.mxu0 0.0
    %403 = vmatpush1.msra.mxu0 0.0
    %404 = vmatprep.subr.mxu0 0.0
    %405 = vmatpush1.msra.mxu0 0.0
    %406 = vmatprep.subr.mxu0 0.0
    %407 = vmatpush1.msra.mxu0 0.0
    %408 = vmatprep.subr.mxu0 0.0
    %409 = vmatpush1.msra.mxu0 0.0
    %410 = vmatprep.subr.mxu0 0.0
    %411 = vmatpush1.msra.mxu0 0.0
    %412 = vmatprep.subr.mxu0 0.0
    %413 = vmatpush1.msra.mxu0 0.0
    %414 = vmatprep.mubr.f32.mxu0 0.0
    %415 = vmatmul.mubr.f32.gmra.mrb[0].mxu0 %v38
    %v416 = vpop.f32.mrb[0].mxu0
    %v417 = vadd.f32 0.0, %v416
    %v418 = vpop.f32.mrb[0].mxu0
    %v419 = vadd.f32 0.0, %v418
    %420 = vdwg.mxu0
    %421 = vmatprep.subr.mxu0 %v44
    %422 = vmatpush1.msra.mxu0 %v43
    %423 = vmatprep.subr.mxu0 %v59
    %424 = vmatpush1.msra.mxu0 %v58
    %425 = vmatprep.subr.mxu0 %v74
    %426 = vmatpush1.msra.mxu0 %v73
    %427 = vmatprep.subr.mxu0 %v89
    %428 = vmatpush1.msra.mxu0 %v88
    %429 = vmatprep.subr.mxu0 %v104
    %430 = vmatpush1.msra.mxu0 %v103
    %431 = vmatprep.subr.mxu0 %v119
    %432 = vmatpush1.msra.mxu0 %v118
    %433 = vmatprep.subr.mxu0 %v134
    %434 = vmatpush1.msra.mxu0 %v133
    %435 = vmatprep.subr.mxu0 %v149
    %436 = vmatpush1.msra.mxu0 %v148
    %437 = vmatprep.subr.mxu0 %v164
    %438 = vmatpush1.msra.mxu0 %v163
    %439 = vmatprep.subr.mxu0 %v179
    %440 = vmatpush1.msra.mxu0 %v178
    %441 = vmatprep.subr.mxu0 %v194
    %442 = vmatpush1.msra.mxu0 %v193
    %443 = vmatprep.subr.mxu0 %v209
    %444 = vmatpush1.msra.mxu0 %v208
    %445 = vmatprep.subr.mxu0 %v224
    %446 = vmatpush1.msra.mxu0 %v223
    %447 = vmatprep.subr.mxu0 %v239
    %448 = vmatpush1.msra.mxu0 %v238
    %449 = vmatprep.subr.mxu0 %v254
    %450 = vmatpush1.msra.mxu0 %v253
    %451 = vmatprep.subr.mxu0 %v269
    %452 = vmatpush1.msra.mxu0 %v268
    %453 = vmatprep.subr.mxu0 0.0
    %454 = vmatpush1.msra.mxu0 0.0
    %455 = vmatprep.subr.mxu0 0.0
    %456 = vmatpush1.msra.mxu0 0.0
    %457 = vmatprep.subr.mxu0 0.0
    %458 = vmatpush1.msra.mxu0 0.0
    %459 = vmatprep.subr.mxu0 0.0
    %460 = vmatpush1.msra.mxu0 0.0
    %461 = vmatprep.subr.mxu0 0.0
    %462 = vmatpush1.msra.mxu0 0.0
    %463 = vmatprep.subr.mxu0 0.0
    %464 = vmatpush1.msra.mxu0 0.0
    %465 = vmatprep.subr.mxu0 0.0
    %466 = vmatpush1.msra.mxu0 0.0
    %467 = vmatprep.subr.mxu0 0.0
    %468 = vmatpush1.msra.mxu0 0.0
    %469 = vmatprep.subr.mxu0 0.0
    %470 = vmatpush1.msra.mxu0 0.0
    %471 = vmatprep.subr.mxu0 0.0
    %472 = vmatpush1.msra.mxu0 0.0
    %473 = vmatprep.subr.mxu0 0.0
    %474 = vmatpush1.msra.mxu0 0.0
    %475 = vmatprep.subr.mxu0 0.0
    %476 = vmatpush1.msra.mxu0 0.0
    %477 = vmatprep.subr.mxu0 0.0
    %478 = vmatpush1.msra.mxu0 0.0
    %479 = vmatprep.subr.mxu0 0.0
    %480 = vmatpush1.msra.mxu0 0.0
    %481 = vmatprep.subr.mxu0 0.0
    %482 = vmatpush1.msra.mxu0 0.0
    %483 = vmatprep.subr.mxu0 0.0
    %484 = vmatpush1.msra.mxu0 0.0
    %485 = vmatprep.mubr.f32.mxu0 0.0
    %486 = vmatmul.mubr.f32.gmra.mrb[0].mxu0 %v38
    %v487 = vpop.f32.mrb[0].mxu0
    %v488 = vadd.f32 0.0, %v487
    %v489 = vpop.f32.mrb[0].mxu0
    %v490 = vadd.f32 0.0, %v489
    %491 = vdwg.mxu0
    %492 = vmatprep.subr.mxu0 %v46
    %493 = vmatpush1.msra.mxu0 %v45
    %494 = vmatprep.subr.mxu0 %v61
    %495 = vmatpush1.msra.mxu0 %v60
    %496 = vmatprep.subr.mxu0 %v76
    %497 = vmatpush1.msra.mxu0 %v75
    %498 = vmatprep.subr.mxu0 %v91
    %499 = vmatpush1.msra.mxu0 %v90
    %500 = vmatprep.subr.mxu0 %v106
    %501 = vmatpush1.msra.mxu0 %v105
    %502 = vmatprep.subr.mxu0 %v121
    %503 = vmatpush1.msra.mxu0 %v120
    %504 = vmatprep.subr.mxu0 %v136
    %505 = vmatpush1.msra.mxu0 %v135
    %506 = vmatprep.subr.mxu0 %v151
    %507 = vmatpush1.msra.mxu0 %v150
    %508 = vmatprep.subr.mxu0 %v166
    %509 = vmatpush1.msra.mxu0 %v165
    %510 = vmatprep.subr.mxu0 %v181
    %511 = vmatpush1.msra.mxu0 %v180
    %512 = vmatprep.subr.mxu0 %v196
    %513 = vmatpush1.msra.mxu0 %v195
    %514 = vmatprep.subr.mxu0 %v211
    %515 = vmatpush1.msra.mxu0 %v210
    %516 = vmatprep.subr.mxu0 %v226
    %517 = vmatpush1.msra.mxu0 %v225
    %518 = vmatprep.subr.mxu0 %v241
    %519 = vmatpush1.msra.mxu0 %v240
    %520 = vmatprep.subr.mxu0 %v256
    %521 = vmatpush1.msra.mxu0 %v255
    %522 = vmatprep.subr.mxu0 %v271
    %523 = vmatpush1.msra.mxu0 %v270
    %524 = vmatprep.subr.mxu0 0.0
    %525 = vmatpush1.msra.mxu0 0.0
    %526 = vmatprep.subr.mxu0 0.0
    %527 = vmatpush1.msra.mxu0 0.0
    %528 = vmatprep.subr.mxu0 0.0
    %529 = vmatpush1.msra.mxu0 0.0
    %530 = vmatprep.subr.mxu0 0.0
    %531 = vmatpush1.msra.mxu0 0.0
    %532 = vmatprep.subr.mxu0 0.0
    %533 = vmatpush1.msra.mxu0 0.0
    %534 = vmatprep.subr.mxu0 0.0
    %535 = vmatpush1.msra.mxu0 0.0
    %536 = vmatprep.subr.mxu0 0.0
    %537 = vmatpush1.msra.mxu0 0.0
    %538 = vmatprep.subr.mxu0 0.0
    %539 = vmatpush1.msra.mxu0 0.0
    %540 = vmatprep.subr.mxu0 0.0
    %541 = vmatpush1.msra.mxu0 0.0
    %542 = vmatprep.subr.mxu0 0.0
    %543 = vmatpush1.msra.mxu0 0.0
    %544 = vmatprep.subr.mxu0 0.0
    %545 = vmatpush1.msra.mxu0 0.0
    %546 = vmatprep.subr.mxu0 0.0
    %547 = vmatpush1.msra.mxu0 0.0
    %548 = vmatprep.subr.mxu0 0.0
    %549 = vmatpush1.msra.mxu0 0.0
    %550 = vmatprep.subr.mxu0 0.0
    %551 = vmatpush1.msra.mxu0 0.0
    %552 = vmatprep.subr.mxu0 0.0
    %553 = vmatpush1.msra.mxu0 0.0
    %554 = vmatprep.subr.mxu0 0.0
    %555 = vmatpush1.msra.mxu0 0.0
    %556 = vmatprep.mubr.f32.mxu0 0.0
    %557 = vmatmul.mubr.f32.gmra.mrb[0].mxu0 %v38
    %v558 = vpop.f32.mrb[0].mxu0
    %v559 = vadd.f32 0.0, %v558
    %v560 = vpop.f32.mrb[0].mxu0
    %v561 = vadd.f32 0.0, %v560
    %562 = vdwg.mxu0
    %563 = vmatprep.subr.mxu0 %v48
    %564 = vmatpush1.msra.mxu0 %v47
    %565 = vmatprep.subr.mxu0 %v63
    %566 = vmatpush1.msra.mxu0 %v62
    %567 = vmatprep.subr.mxu0 %v78
    %568 = vmatpush1.msra.mxu0 %v77
    %569 = vmatprep.subr.mxu0 %v93
    %570 = vmatpush1.msra.mxu0 %v92
    %571 = vmatprep.subr.mxu0 %v108
    %572 = vmatpush1.msra.mxu0 %v107
    %573 = vmatprep.subr.mxu0 %v123
    %574 = vmatpush1.msra.mxu0 %v122
    %575 = vmatprep.subr.mxu0 %v138
    %576 = vmatpush1.msra.mxu0 %v137
    %577 = vmatprep.subr.mxu0 %v153
    %578 = vmatpush1.msra.mxu0 %v152
    %579 = vmatprep.subr.mxu0 %v168
    %580 = vmatpush1.msra.mxu0 %v167
    %581 = vmatprep.subr.mxu0 %v183
    %582 = vmatpush1.msra.mxu0 %v182
    %583 = vmatprep.subr.mxu0 %v198
    %584 = vmatpush1.msra.mxu0 %v197
    %585 = vmatprep.subr.mxu0 %v213
    %586 = vmatpush1.msra.mxu0 %v212
    %587 = vmatprep.subr.mxu0 %v228
    %588 = vmatpush1.msra.mxu0 %v227
    %589 = vmatprep.subr.mxu0 %v243
    %590 = vmatpush1.msra.mxu0 %v242
    %591 = vmatprep.subr.mxu0 %v258
    %592 = vmatpush1.msra.mxu0 %v257
    %593 = vmatprep.subr.mxu0 %v273
    %594 = vmatpush1.msra.mxu0 %v272
    %595 = vmatprep.subr.mxu0 0.0
    %596 = vmatpush1.msra.mxu0 0.0
    %597 = vmatprep.subr.mxu0 0.0
    %598 = vmatpush1.msra.mxu0 0.0
    %599 = vmatprep.subr.mxu0 0.0
    %600 = vmatpush1.msra.mxu0 0.0
    %601 = vmatprep.subr.mxu0 0.0
    %602 = vmatpush1.msra.mxu0 0.0
    %603 = vmatprep.subr.mxu0 0.0
    %604 = vmatpush1.msra.mxu0 0.0
    %605 = vmatprep.subr.mxu0 0.0
    %606 = vmatpush1.msra.mxu0 0.0
    %607 = vmatprep.subr.mxu0 0.0
    %608 = vmatpush1.msra.mxu0 0.0
    %609 = vmatprep.subr.mxu0 0.0
    %610 = vmatpush1.msra.mxu0 0.0
    %611 = vmatprep.subr.mxu0 0.0
    %612 = vmatpush1.msra.mxu0 0.0
    %613 = vmatprep.subr.mxu0 0.0
    %614 = vmatpush1.msra.mxu0 0.0
    %615 = vmatprep.subr.mxu0 0.0
    %616 = vmatpush1.msra.mxu0 0.0
    %617 = vmatprep.subr.mxu0 0.0
    %618 = vmatpush1.msra.mxu0 0.0
    %619 = vmatprep.subr.mxu0 0.0
    %620 = vmatpush1.msra.mxu0 0.0
    %621 = vmatprep.subr.mxu0 0.0
    %622 = vmatpush1.msra.mxu0 0.0
    %623 = vmatprep.subr.mxu0 0.0
    %624 = vmatpush1.msra.mxu0 0.0
    %625 = vmatprep.subr.mxu0 0.0
    %626 = vmatpush1.msra.mxu0 0.0
    %627 = vmatprep.mubr.f32.mxu0 0.0
    %628 = vmatmul.mubr.f32.gmra.mrb[0].mxu0 %v38
    %v629 = vpop.f32.mrb[0].mxu0
    %v630 = vadd.f32 0.0, %v629
    %v631 = vpop.f32.mrb[0].mxu0
    %v632 = vadd.f32 0.0, %v631
    %633 = vdwg.mxu0
    %634 = vmatprep.subr.mxu0 %v50
    %635 = vmatpush1.msra.mxu0 %v49
    %636 = vmatprep.subr.mxu0 %v65
    %637 = vmatpush1.msra.mxu0 %v64
    %638 = vmatprep.subr.mxu0 %v80
    %639 = vmatpush1.msra.mxu0 %v79
    %640 = vmatprep.subr.mxu0 %v95
    %641 = vmatpush1.msra.mxu0 %v94
    %642 = vmatprep.subr.mxu0 %v110
    %643 = vmatpush1.msra.mxu0 %v109
    %644 = vmatprep.subr.mxu0 %v125
    %645 = vmatpush1.msra.mxu0 %v124
    %646 = vmatprep.subr.mxu0 %v140
    %647 = vmatpush1.msra.mxu0 %v139
    %648 = vmatprep.subr.mxu0 %v155
    %649 = vmatpush1.msra.mxu0 %v154
    %650 = vmatprep.subr.mxu0 %v170
    %651 = vmatpush1.msra.mxu0 %v169
    %652 = vmatprep.subr.mxu0 %v185
    %653 = vmatpush1.msra.mxu0 %v184
    %654 = vmatprep.subr.mxu0 %v200
    %655 = vmatpush1.msra.mxu0 %v199
    %656 = vmatprep.subr.mxu0 %v215
    %657 = vmatpush1.msra.mxu0 %v214
    %658 = vmatprep.subr.mxu0 %v230
    %659 = vmatpush1.msra.mxu0 %v229
    %660 = vmatprep.subr.mxu0 %v245
    %661 = vmatpush1.msra.mxu0 %v244
    %662 = vmatprep.subr.mxu0 %v260
    %663 = vmatpush1.msra.mxu0 %v259
    %664 = vmatprep.subr.mxu0 %v275
    %665 = vmatpush1.msra.mxu0 %v274
    %666 = vmatprep.subr.mxu0 0.0
    %667 = vmatpush1.msra.mxu0 0.0
    %668 = vmatprep.subr.mxu0 0.0
    %669 = vmatpush1.msra.mxu0 0.0
    %670 = vmatprep.subr.mxu0 0.0
    %671 = vmatpush1.msra.mxu0 0.0
    %672 = vmatprep.subr.mxu0 0.0
    %673 = vmatpush1.msra.mxu0 0.0
    %674 = vmatprep.subr.mxu0 0.0
    %675 = vmatpush1.msra.mxu0 0.0
    %676 = vmatprep.subr.mxu0 0.0
    %677 = vmatpush1.msra.mxu0 0.0
    %678 = vmatprep.subr.mxu0 0.0
    %679 = vmatpush1.msra.mxu0 0.0
    %680 = vmatprep.subr.mxu0 0.0
    %681 = vmatpush1.msra.mxu0 0.0
    %682 = vmatprep.subr.mxu0 0.0
    %683 = vmatpush1.msra.mxu0 0.0
    %684 = vmatprep.subr.mxu0 0.0
    %685 = vmatpush1.msra.mxu0 0.0
    %686 = vmatprep.subr.mxu0 0.0
    %687 = vmatpush1.msra.mxu0 0.0
    %688 = vmatprep.subr.mxu0 0.0
    %689 = vmatpush1.msra.mxu0 0.0
    %690 = vmatprep.subr.mxu0 0.0
    %691 = vmatpush1.msra.mxu0 0.0
    %692 = vmatprep.subr.mxu0 0.0
    %693 = vmatpush1.msra.mxu0 0.0
    %694 = vmatprep.subr.mxu0 0.0
    %695 = vmatpush1.msra.mxu0 0.0
    %696 = vmatprep.subr.mxu0 0.0
    %697 = vmatpush1.msra.mxu0 0.0
    %698 = vmatprep.mubr.f32.mxu0 0.0
    %699 = vmatmul.mubr.f32.gmra.mrb[0].mxu0 %v38
    %v700 = vpop.f32.mrb[0].mxu0
    %v701 = vadd.f32 0.0, %v700
    %v702 = vpop.f32.mrb[0].mxu0
    %v703 = vadd.f32 0.0, %v702
    %704 = vdwg.mxu0
    %705 = vmatprep.subr.mxu0 %v52
    %706 = vmatpush1.msra.mxu0 %v51
    %707 = vmatprep.subr.mxu0 %v67
    %708 = vmatpush1.msra.mxu0 %v66
    %709 = vmatprep.subr.mxu0 %v82
    %710 = vmatpush1.msra.mxu0 %v81
    %711 = vmatprep.subr.mxu0 %v97
    %712 = vmatpush1.msra.mxu0 %v96
    %713 = vmatprep.subr.mxu0 %v112
    %714 = vmatpush1.msra.mxu0 %v111
    %715 = vmatprep.subr.mxu0 %v127
    %716 = vmatpush1.msra.mxu0 %v126
    %717 = vmatprep.subr.mxu0 %v142
    %718 = vmatpush1.msra.mxu0 %v141
    %719 = vmatprep.subr.mxu0 %v157
    %720 = vmatpush1.msra.mxu0 %v156
    %721 = vmatprep.subr.mxu0 %v172
    %722 = vmatpush1.msra.mxu0 %v171
    %723 = vmatprep.subr.mxu0 %v187
    %724 = vmatpush1.msra.mxu0 %v186
    %725 = vmatprep.subr.mxu0 %v202
    %726 = vmatpush1.msra.mxu0 %v201
    %727 = vmatprep.subr.mxu0 %v217
    %728 = vmatpush1.msra.mxu0 %v216
    %729 = vmatprep.subr.mxu0 %v232
    %730 = vmatpush1.msra.mxu0 %v231
    %731 = vmatprep.subr.mxu0 %v247
    %732 = vmatpush1.msra.mxu0 %v246
    %733 = vmatprep.subr.mxu0 %v262
    %734 = vmatpush1.msra.mxu0 %v261
    %735 = vmatprep.subr.mxu0 %v277
    %736 = vmatpush1.msra.mxu0 %v276
    %737 = vmatprep.subr.mxu0 0.0
    %738 = vmatpush1.msra.mxu0 0.0
    %739 = vmatprep.subr.mxu0 0.0
    %740 = vmatpush1.msra.mxu0 0.0
    %741 = vmatprep.subr.mxu0 0.0
    %742 = vmatpush1.msra.mxu0 0.0
    %743 = vmatprep.subr.mxu0 0.0
    %744 = vmatpush1.msra.mxu0 0.0
    %745 = vmatprep.subr.mxu0 0.0
    %746 = vmatpush1.msra.mxu0 0.0
    %747 = vmatprep.subr.mxu0 0.0
    %748 = vmatpush1.msra.mxu0 0.0
    %749 = vmatprep.subr.mxu0 0.0
    %750 = vmatpush1.msra.mxu0 0.0
    %751 = vmatprep.subr.mxu0 0.0
    %752 = vmatpush1.msra.mxu0 0.0
    %753 = vmatprep.subr.mxu0 0.0
    %754 = vmatpush1.msra.mxu0 0.0
    %755 = vmatprep.subr.mxu0 0.0
    %756 = vmatpush1.msra.mxu0 0.0
    %757 = vmatprep.subr.mxu0 0.0
    %758 = vmatpush1.msra.mxu0 0.0
    %759 = vmatprep.subr.mxu0 0.0
    %760 = vmatpush1.msra.mxu0 0.0
    %761 = vmatprep.subr.mxu0 0.0
    %762 = vmatpush1.msra.mxu0 0.0
    %763 = vmatprep.subr.mxu0 0.0
    %764 = vmatpush1.msra.mxu0 0.0
    %765 = vmatprep.subr.mxu0 0.0
    %766 = vmatpush1.msra.mxu0 0.0
    %767 = vmatprep.subr.mxu0 0.0
    %768 = vmatpush1.msra.mxu0 0.0
    %769 = vmatprep.mubr.f32.mxu0 0.0
    %770 = vmatmul.mubr.f32.gmra.mrb[0].mxu0 %v38
    %v771 = vpop.f32.mrb[0].mxu0
    %v772 = vadd.f32 0.0, %v771
    %v773 = vpop.f32.mrb[0].mxu0
    %v774 = vadd.f32 0.0, %v773
    %775 = vdwg.mxu0
    %776 = vmatprep.subr.mxu0 0.0
    %777 = vmatpush1.msra.mxu0 %v53
    %778 = vmatprep.subr.mxu0 0.0
    %779 = vmatpush1.msra.mxu0 %v68
    %780 = vmatprep.subr.mxu0 0.0
    %781 = vmatpush1.msra.mxu0 %v83
    %782 = vmatprep.subr.mxu0 0.0
    %783 = vmatpush1.msra.mxu0 %v98
    %784 = vmatprep.subr.mxu0 0.0
    %785 = vmatpush1.msra.mxu0 %v113
    %786 = vmatprep.subr.mxu0 0.0
    %787 = vmatpush1.msra.mxu0 %v128
    %788 = vmatprep.subr.mxu0 0.0
    %789 = vmatpush1.msra.mxu0 %v143
    %790 = vmatprep.subr.mxu0 0.0
    %791 = vmatpush1.msra.mxu0 %v158
    %792 = vmatprep.subr.mxu0 0.0
    %793 = vmatpush1.msra.mxu0 %v173
    %794 = vmatprep.subr.mxu0 0.0
    %795 = vmatpush1.msra.mxu0 %v188
    %796 = vmatprep.subr.mxu0 0.0
    %797 = vmatpush1.msra.mxu0 %v203
    %798 = vmatprep.subr.mxu0 0.0
    %799 = vmatpush1.msra.mxu0 %v218
    %800 = vmatprep.subr.mxu0 0.0
    %801 = vmatpush1.msra.mxu0 %v233
    %802 = vmatprep.subr.mxu0 0.0
    %803 = vmatpush1.msra.mxu0 %v248
    %804 = vmatprep.subr.mxu0 0.0
    %805 = vmatpush1.msra.mxu0 %v263
    %806 = vmatprep.subr.mxu0 0.0
    %807 = vmatpush1.msra.mxu0 %v278
    %808 = vmatprep.subr.mxu0 0.0
    %809 = vmatpush1.msra.mxu0 0.0
    %810 = vmatprep.subr.mxu0 0.0
    %811 = vmatpush1.msra.mxu0 0.0
    %812 = vmatprep.subr.mxu0 0.0
    %813 = vmatpush1.msra.mxu0 0.0
    %814 = vmatprep.subr.mxu0 0.0
    %815 = vmatpush1.msra.mxu0 0.0
    %816 = vmatprep.subr.mxu0 0.0
    %817 = vmatpush1.msra.mxu0 0.0
    %818 = vmatprep.subr.mxu0 0.0
    %819 = vmatpush1.msra.mxu0 0.0
    %820 = vmatprep.subr.mxu0 0.0
    %821 = vmatpush1.msra.mxu0 0.0
    %822 = vmatprep.subr.mxu0 0.0
    %823 = vmatpush1.msra.mxu0 0.0
    %824 = vmatprep.subr.mxu0 0.0
    %825 = vmatpush1.msra.mxu0 0.0
    %826 = vmatprep.subr.mxu0 0.0
    %827 = vmatpush1.msra.mxu0 0.0
    %828 = vmatprep.subr.mxu0 0.0
    %829 = vmatpush1.msra.mxu0 0.0
    %830 = vmatprep.subr.mxu0 0.0
    %831 = vmatpush1.msra.mxu0 0.0
    %832 = vmatprep.subr.mxu0 0.0
    %833 = vmatpush1.msra.mxu0 0.0
    %834 = vmatprep.subr.mxu0 0.0
    %835 = vmatpush1.msra.mxu0 0.0
    %836 = vmatprep.subr.mxu0 0.0
    %837 = vmatpush1.msra.mxu0 0.0
    %838 = vmatprep.subr.mxu0 0.0
    %839 = vmatpush1.msra.mxu0 0.0
    %840 = vmatprep.mubr.f32.mxu0 0.0
    %841 = vmatmul.mubr.f32.gmra.mrb[0].mxu0 %v38
    %v842 = vpop.f32.mrb[0].mxu0
    %v843 = vadd.f32 0.0, %v842
    %v844 = vpop.f32.mrb[0].mxu0
    %845 = vdwg.mxu0
    %v846 = vand.u32 2147483647, %v346
    %vm847 = vcmp.le.f32.partialorder %v846, 0.7853982
    %vm848 = vcmp.lt.s32.totalorder %v346, 0
    %v849 = vand.u32 %v346, 2139095040
    %v850 = vshrl.u32 %v849, 23
    %v851 = vsub.s32 %v850, 127
    %v852 = vand.u32 2147483647, %v346
    %v853 = vand.u32 %v852, 8388607
    %v854 = vor.u32 %v853, 8388608
    %v855 = vsub.s32 0, %v854
    %v856 = vadd.s32 %v851, 1
    %vm857 = vcmp.gt.s32.totalorder %v856, 0
    %v858 = vsel %vm857, %v856, 0
    %v859 = vshrl.u32 %v858, 5
    %v860 = vand.u32 %v858, 31
    %v861 = vsub.s32 32, %v860
    %v862 = vshrl.u32 683565275, %v861
    %v863 = vshll.u32 683565275, %v860
    %v864 = vshrl.u32 2475754826, %v861
    %v865 = vor.u32 %v863, %v864
    %v866 = vshll.u32 2475754826, %v860
    %v867 = vshrl.u32 2131351028, %v861
    %v868 = vor.u32 %v866, %v867
    %v869 = vshll.u32 2131351028, %v860
    %v870 = vshrl.u32 2102212464, %v861
    %v871 = vor.u32 %v869, %v870
    %v872 = vshll.u32 2102212464, %v860
    %v873 = vshrl.u32 920167782, %v861
    %v874 = vor.u32 %v872, %v873
    %v875 = vshll.u32 920167782, %v860
    %v876 = vshrl.u32 1326507024, %v861
    %v877 = vor.u32 %v875, %v876
    %vm878 = vcmp.lt.s32.totalorder %v859, 1
    %vm879 = vcmp.lt.s32.totalorder %v859, 2
    %vm880 = vcmp.lt.s32.totalorder %v859, 3
    %vm881 = vcmp.lt.s32.totalorder %v859, 4
    %v882 = vsel %vm878, %v862, %v865
    %v883 = vsel %vm881, %v871, 2102212464
    %v884 = vsel %vm880, %v868, %v883
    %v885 = vsel %vm879, %v882, %v884
    %v886 = vsel %vm878, %v865, %v868
    %v887 = vsel %vm881, %v874, 920167782
    %v888 = vsel %vm880, %v871, %v887
    %v889 = vsel %vm879, %v886, %v888
    %v890 = vsel %vm878, %v868, %v871
    %v891 = vsel %vm881, %v877, 1326507024
    %v892 = vsel %vm880, %v874, %v891
    %v893 = vsel %vm879, %v890, %v892
    %v894 = vshll.u32 %v854, 8
    %v895 = vmul.u32.u64.compose %v894, %v893
    %v896 = vextract.low.u32 %v895
    %v897 = vextract.high.u32 %v895
    %v898 = vmul.u32.u64.compose %v894, %v889
    %v899 = vextract.low.u32 %v898
    %v900 = vextract.high.u32 %v898
    %v901 = vmul.u32 %v894, %v885
    %v902 = vadd.s32 %v897, %v899
    %vm903 = vc.u32 %v897, %v899
    %v904 = vadd.s32 %v900, 1
    %v905 = vsel %vm903, %v904, %v900
    %v906 = vadd.s32 %v901, %v905
    %v907 = vadd.s32 %v906, 536870912
    %v908 = vshrl.u32 %v907, 30
    %v909 = vshll.u32 %v908, 30
    %v910 = vsub.s32 %v906, %v909
    %vm911 = vcmp.lt.s32.totalorder %v910, 0
    %v912 = vsub.s32 0, %v910
    %v913 = vsel %vm911, %v912, %v910
    %v914 = vclz %v913
    %v915 = vsub.s32 %v914, 2
    %vm916 = vcmp.gt.s32.totalorder 0, %v915
    %v917 = vsel %vm916, 0, %v915
    %v918 = vsub.s32 32, %v917
    %v919 = vshll.u32 %v910, %v917
    %v920 = vshrl.u32 %v902, %v918
    %v921 = vor.u32 %v919, %v920
    %v922 = vsub.s32 4294967266, %v917
    %v923 = vadd.s32 %v922, 127
    %v924 = vshll.u32 %v923, 23
    %v925 = vor.u32 4788187, %v924
    %v926 = vand.u32 2147483647, %v925
    %v928 = vcvt.s32.f32 %v921
    %v929 = vmul.f32 %v928, %v926
    %v930 = vxor.u32 %v929, 2147483648
    %v931 = vsel %vm848, %v930, %v929
    %v932 = vsub.s32 4, %v908
    %v933 = vsel %vm848, %v932, %v908
    %v934 = vsel %vm847, %v346, %v931
    %v935 = vsel %vm847, 0, %v933
    %v936 = vcosq.f32.pop %v934
    %v937 = vsinq.f32.pop %v934
    %vm938 = vweird.f32 %v346
    %v939 = vadd.s32 %v935, 3
    %v940 = vand.u32 %v939, 3
    %vm941 = vcmp.lt.s32.totalorder %v940, 2
    %vm942 = vcmp.eq.s32.totalorder %v940, 0
    %v943 = vxor.u32 %v937, 2147483648
    %v944 = vsel %vm942, %v936, %v943
    %vm945 = vcmp.eq.s32.totalorder %v940, 2
    %v946 = vxor.u32 %v936, 2147483648
    %v947 = vsel %vm945, %v946, %v937
    %v948 = vsel %vm941, %v944, %v947
    %v949 = vsel %vm938, nan, %v948
    %v950 = vand.u32 2147483647, %v348
    %vm951 = vcmp.le.f32.partialorder %v950, 0.7853982
    %vm952 = vcmp.lt.s32.totalorder %v348, 0
    %v953 = vand.u32 %v348, 2139095040
    %v954 = vshrl.u32 %v953, 23
    %v955 = vsub.s32 %v954, 127
    %v956 = vand.u32 2147483647, %v348
    %v957 = vand.u32 %v956, 8388607
    %v958 = vor.u32 %v957, 8388608
    %v959 = vsub.s32 0, %v958
    %v960 = vadd.s32 %v955, 1
    %vm961 = vcmp.gt.s32.totalorder %v960, 0
    %v962 = vsel %vm961, %v960, 0
    %v963 = vshrl.u32 %v962, 5
    %v964 = vand.u32 %v962, 31
    %v965 = vsub.s32 32, %v964
    %v966 = vshrl.u32 683565275, %v965
    %v967 = vshll.u32 683565275, %v964
    %v968 = vshrl.u32 2475754826, %v965
    %v969 = vor.u32 %v967, %v968
    %v970 = vshll.u32 2475754826, %v964
    %v971 = vshrl.u32 2131351028, %v965
    %v972 = vor.u32 %v970, %v971
    %v973 = vshll.u32 2131351028, %v964
    %v974 = vshrl.u32 2102212464, %v965
    %v975 = vor.u32 %v973, %v974
    %v976 = vshll.u32 2102212464, %v964
    %v977 = vshrl.u32 920167782, %v965
    %v978 = vor.u32 %v976, %v977
    %v979 = vshll.u32 920167782, %v964
    %v980 = vshrl.u32 1326507024, %v965
    %v981 = vor.u32 %v979, %v980
    %vm982 = vcmp.lt.s32.totalorder %v963, 1
    %vm983 = vcmp.lt.s32.totalorder %v963, 2
    %vm984 = vcmp.lt.s32.totalorder %v963, 3
    %vm985 = vcmp.lt.s32.totalorder %v963, 4
    %v986 = vsel %vm982, %v966, %v969
    %v987 = vsel %vm985, %v975, 2102212464
    %v988 = vsel %vm984, %v972, %v987
    %v989 = vsel %vm983, %v986, %v988
    %v990 = vsel %vm982, %v969, %v972
    %v991 = vsel %vm985, %v978, 920167782
    %v992 = vsel %vm984, %v975, %v991
    %v993 = vsel %vm983, %v990, %v992
    %v994 = vsel %vm982, %v972, %v975
    %v995 = vsel %vm985, %v981, 1326507024
    %v996 = vsel %vm984, %v978, %v995
    %v997 = vsel %vm983, %v994, %v996
    %v998 = vshll.u32 %v958, 8
    %v999 = vmul.u32.u64.compose %v998, %v997
    %v1000 = vextract.low.u32 %v999
    %v1001 = vextract.high.u32 %v999
    %v1002 = vmul.u32.u64.compose %v998, %v993
    %v1003 = vextract.low.u32 %v1002
    %v1004 = vextract.high.u32 %v1002
    %v1005 = vmul.u32 %v998, %v989
    %v1006 = vadd.s32 %v1001, %v1003
    %vm1007 = vc.u32 %v1001, %v1003
    %v1008 = vadd.s32 %v1004, 1
    %v1009 = vsel %vm1007, %v1008, %v1004
    %v1010 = vadd.s32 %v1005, %v1009
    %v1011 = vadd.s32 %v1010, 536870912
    %v1012 = vshrl.u32 %v1011, 30
    %v1013 = vshll.u32 %v1012, 30
    %v1014 = vsub.s32 %v1010, %v1013
    %vm1015 = vcmp.lt.s32.totalorder %v1014, 0
    %v1016 = vsub.s32 0, %v1014
    %v1017 = vsel %vm1015, %v1016, %v1014
    %v1018 = vclz %v1017
    %v1019 = vsub.s32 %v1018, 2
    %vm1020 = vcmp.gt.s32.totalorder 0, %v1019
    %v1021 = vsel %vm1020, 0, %v1019
    %v1022 = vsub.s32 32, %v1021
    %v1023 = vshll.u32 %v1014, %v1021
    %v1024 = vshrl.u32 %v1006, %v1022
    %v1025 = vor.u32 %v1023, %v1024
    %v1026 = vsub.s32 4294967266, %v1021
    %v1027 = vadd.s32 %v1026, 127
    %v1028 = vshll.u32 %v1027, 23
    %v1029 = vor.u32 4788187, %v1028
    %v1030 = vand.u32 2147483647, %v1029
    %v1032 = vcvt.s32.f32 %v1025
    %v1033 = vmul.f32 %v1032, %v1030
    %v1034 = vxor.u32 %v1033, 2147483648
    %v1035 = vsel %vm952, %v1034, %v1033
    %v1036 = vsub.s32 4, %v1012
    %v1037 = vsel %vm952, %v1036, %v1012
    %v1038 = vsel %vm951, %v348, %v1035
    %v1039 = vsel %vm951, 0, %v1037
    %v1040 = vcosq.f32.pop %v1038
    %v1041 = vsinq.f32.pop %v1038
    %vm1042 = vweird.f32 %v348
    %v1043 = vadd.s32 %v1039, 3
    %v1044 = vand.u32 %v1043, 3
    %vm1045 = vcmp.lt.s32.totalorder %v1044, 2
    %vm1046 = vcmp.eq.s32.totalorder %v1044, 0
    %v1047 = vxor.u32 %v1041, 2147483648
    %v1048 = vsel %vm1046, %v1040, %v1047
    %vm1049 = vcmp.eq.s32.totalorder %v1044, 2
    %v1050 = vxor.u32 %v1040, 2147483648
    %v1051 = vsel %vm1049, %v1050, %v1041
    %v1052 = vsel %vm1045, %v1048, %v1051
    %v1053 = vsel %vm1042, nan, %v1052
    %v1054 = vand.u32 2147483647, %v417
    %vm1055 = vcmp.le.f32.partialorder %v1054, 0.7853982
    %vm1056 = vcmp.lt.s32.totalorder %v417, 0
    %v1057 = vand.u32 %v417, 2139095040
    %v1058 = vshrl.u32 %v1057, 23
    %v1059 = vsub.s32 %v1058, 127
    %v1060 = vand.u32 2147483647, %v417
    %v1061 = vand.u32 %v1060, 8388607
    %v1062 = vor.u32 %v1061, 8388608
    %v1063 = vsub.s32 0, %v1062
    %v1064 = vadd.s32 %v1059, 1
    %vm1065 = vcmp.gt.s32.totalorder %v1064, 0
    %v1066 = vsel %vm1065, %v1064, 0
    %v1067 = vshrl.u32 %v1066, 5
    %v1068 = vand.u32 %v1066, 31
    %v1069 = vsub.s32 32, %v1068
    %v1070 = vshrl.u32 683565275, %v1069
    %v1071 = vshll.u32 683565275, %v1068
    %v1072 = vshrl.u32 2475754826, %v1069
    %v1073 = vor.u32 %v1071, %v1072
    %v1074 = vshll.u32 2475754826, %v1068
    %v1075 = vshrl.u32 2131351028, %v1069
    %v1076 = vor.u32 %v1074, %v1075
    %v1077 = vshll.u32 2131351028, %v1068
    %v1078 = vshrl.u32 2102212464, %v1069
    %v1079 = vor.u32 %v1077, %v1078
    %v1080 = vshll.u32 2102212464, %v1068
    %v1081 = vshrl.u32 920167782, %v1069
    %v1082 = vor.u32 %v1080, %v1081
    %v1083 = vshll.u32 920167782, %v1068
    %v1084 = vshrl.u32 1326507024, %v1069
    %v1085 = vor.u32 %v1083, %v1084
    %vm1086 = vcmp.lt.s32.totalorder %v1067, 1
    %vm1087 = vcmp.lt.s32.totalorder %v1067, 2
    %vm1088 = vcmp.lt.s32.totalorder %v1067, 3
    %vm1089 = vcmp.lt.s32.totalorder %v1067, 4
    %v1090 = vsel %vm1086, %v1070, %v1073
    %v1091 = vsel %vm1089, %v1079, 2102212464
    %v1092 = vsel %vm1088, %v1076, %v1091
    %v1093 = vsel %vm1087, %v1090, %v1092
    %v1094 = vsel %vm1086, %v1073, %v1076
    %v1095 = vsel %vm1089, %v1082, 920167782
    %v1096 = vsel %vm1088, %v1079, %v1095
    %v1097 = vsel %vm1087, %v1094, %v1096
    %v1098 = vsel %vm1086, %v1076, %v1079
    %v1099 = vsel %vm1089, %v1085, 1326507024
    %v1100 = vsel %vm1088, %v1082, %v1099
    %v1101 = vsel %vm1087, %v1098, %v1100
    %v1102 = vshll.u32 %v1062, 8
    %v1103 = vmul.u32.u64.compose %v1102, %v1101
    %v1104 = vextract.low.u32 %v1103
    %v1105 = vextract.high.u32 %v1103
    %v1106 = vmul.u32.u64.compose %v1102, %v1097
    %v1107 = vextract.low.u32 %v1106
    %v1108 = vextract.high.u32 %v1106
    %v1109 = vmul.u32 %v1102, %v1093
    %v1110 = vadd.s32 %v1105, %v1107
    %vm1111 = vc.u32 %v1105, %v1107
    %v1112 = vadd.s32 %v1108, 1
    %v1113 = vsel %vm1111, %v1112, %v1108
    %v1114 = vadd.s32 %v1109, %v1113
    %v1115 = vadd.s32 %v1114, 536870912
    %v1116 = vshrl.u32 %v1115, 30
    %v1117 = vshll.u32 %v1116, 30
    %v1118 = vsub.s32 %v1114, %v1117
    %vm1119 = vcmp.lt.s32.totalorder %v1118, 0
    %v1120 = vsub.s32 0, %v1118
    %v1121 = vsel %vm1119, %v1120, %v1118
    %v1122 = vclz %v1121
    %v1123 = vsub.s32 %v1122, 2
    %vm1124 = vcmp.gt.s32.totalorder 0, %v1123
    %v1125 = vsel %vm1124, 0, %v1123
    %v1126 = vsub.s32 32, %v1125
    %v1127 = vshll.u32 %v1118, %v1125
    %v1128 = vshrl.u32 %v1110, %v1126
    %v1129 = vor.u32 %v1127, %v1128
    %v1130 = vsub.s32 4294967266, %v1125
    %v1131 = vadd.s32 %v1130, 127
    %v1132 = vshll.u32 %v1131, 23
    %v1133 = vor.u32 4788187, %v1132
    %v1134 = vand.u32 2147483647, %v1133
    %v1136 = vcvt.s32.f32 %v1129
    %v1137 = vmul.f32 %v1136, %v1134
    %v1138 = vxor.u32 %v1137, 2147483648
    %v1139 = vsel %vm1056, %v1138, %v1137
    %v1140 = vsub.s32 4, %v1116
    %v1141 = vsel %vm1056, %v1140, %v1116
    %v1142 = vsel %vm1055, %v417, %v1139
    %v1143 = vsel %vm1055, 0, %v1141
    %v1144 = vcosq.f32.pop %v1142
    %v1145 = vsinq.f32.pop %v1142
    %vm1146 = vweird.f32 %v417
    %v1147 = vadd.s32 %v1143, 3
    %v1148 = vand.u32 %v1147, 3
    %vm1149 = vcmp.lt.s32.totalorder %v1148, 2
    %vm1150 = vcmp.eq.s32.totalorder %v1148, 0
    %v1151 = vxor.u32 %v1145, 2147483648
    %v1152 = vsel %vm1150, %v1144, %v1151
    %vm1153 = vcmp.eq.s32.totalorder %v1148, 2
    %v1154 = vxor.u32 %v1144, 2147483648
    %v1155 = vsel %vm1153, %v1154, %v1145
    %v1156 = vsel %vm1149, %v1152, %v1155
    %v1157 = vsel %vm1146, nan, %v1156
    %v1158 = vand.u32 2147483647, %v419
    %vm1159 = vcmp.le.f32.partialorder %v1158, 0.7853982
    %vm1160 = vcmp.lt.s32.totalorder %v419, 0
    %v1161 = vand.u32 %v419, 2139095040
    %v1162 = vshrl.u32 %v1161, 23
    %v1163 = vsub.s32 %v1162, 127
    %v1164 = vand.u32 2147483647, %v419
    %v1165 = vand.u32 %v1164, 8388607
    %v1166 = vor.u32 %v1165, 8388608
    %v1167 = vsub.s32 0, %v1166
    %v1168 = vadd.s32 %v1163, 1
    %vm1169 = vcmp.gt.s32.totalorder %v1168, 0
    %v1170 = vsel %vm1169, %v1168, 0
    %v1171 = vshrl.u32 %v1170, 5
    %v1172 = vand.u32 %v1170, 31
    %v1173 = vsub.s32 32, %v1172
    %v1174 = vshrl.u32 683565275, %v1173
    %v1175 = vshll.u32 683565275, %v1172
    %v1176 = vshrl.u32 2475754826, %v1173
    %v1177 = vor.u32 %v1175, %v1176
    %v1178 = vshll.u32 2475754826, %v1172
    %v1179 = vshrl.u32 2131351028, %v1173
    %v1180 = vor.u32 %v1178, %v1179
    %v1181 = vshll.u32 2131351028, %v1172
    %v1182 = vshrl.u32 2102212464, %v1173
    %v1183 = vor.u32 %v1181, %v1182
    %v1184 = vshll.u32 2102212464, %v1172
    %v1185 = vshrl.u32 920167782, %v1173
    %v1186 = vor.u32 %v1184, %v1185
    %v1187 = vshll.u32 920167782, %v1172
    %v1188 = vshrl.u32 1326507024, %v1173
    %v1189 = vor.u32 %v1187, %v1188
    %vm1190 = vcmp.lt.s32.totalorder %v1171, 1
    %vm1191 = vcmp.lt.s32.totalorder %v1171, 2
    %vm1192 = vcmp.lt.s32.totalorder %v1171, 3
    %vm1193 = vcmp.lt.s32.totalorder %v1171, 4
    %v1194 = vsel %vm1190, %v1174, %v1177
    %v1195 = vsel %vm1193, %v1183, 2102212464
    %v1196 = vsel %vm1192, %v1180, %v1195
    %v1197 = vsel %vm1191, %v1194, %v1196
    %v1198 = vsel %vm1190, %v1177, %v1180
    %v1199 = vsel %vm1193, %v1186, 920167782
    %v1200 = vsel %vm1192, %v1183, %v1199
    %v1201 = vsel %vm1191, %v1198, %v1200
    %v1202 = vsel %vm1190, %v1180, %v1183
    %v1203 = vsel %vm1193, %v1189, 1326507024
    %v1204 = vsel %vm1192, %v1186, %v1203
    %v1205 = vsel %vm1191, %v1202, %v1204
    %v1206 = vshll.u32 %v1166, 8
    %v1207 = vmul.u32.u64.compose %v1206, %v1205
    %v1208 = vextract.low.u32 %v1207
    %v1209 = vextract.high.u32 %v1207
    %v1210 = vmul.u32.u64.compose %v1206, %v1201
    %v1211 = vextract.low.u32 %v1210
    %v1212 = vextract.high.u32 %v1210
    %v1213 = vmul.u32 %v1206, %v1197
    %v1214 = vadd.s32 %v1209, %v1211
    %vm1215 = vc.u32 %v1209, %v1211
    %v1216 = vadd.s32 %v1212, 1
    %v1217 = vsel %vm1215, %v1216, %v1212
    %v1218 = vadd.s32 %v1213, %v1217
    %v1219 = vadd.s32 %v1218, 536870912
    %v1220 = vshrl.u32 %v1219, 30
    %v1221 = vshll.u32 %v1220, 30
    %v1222 = vsub.s32 %v1218, %v1221
    %vm1223 = vcmp.lt.s32.totalorder %v1222, 0
    %v1224 = vsub.s32 0, %v1222
    %v1225 = vsel %vm1223, %v1224, %v1222
    %v1226 = vclz %v1225
    %v1227 = vsub.s32 %v1226, 2
    %vm1228 = vcmp.gt.s32.totalorder 0, %v1227
    %v1229 = vsel %vm1228, 0, %v1227
    %v1230 = vsub.s32 32, %v1229
    %v1231 = vshll.u32 %v1222, %v1229
    %v1232 = vshrl.u32 %v1214, %v1230
    %v1233 = vor.u32 %v1231, %v1232
    %v1234 = vsub.s32 4294967266, %v1229
    %v1235 = vadd.s32 %v1234, 127
    %v1236 = vshll.u32 %v1235, 23
    %v1237 = vor.u32 4788187, %v1236
    %v1238 = vand.u32 2147483647, %v1237
    %v1240 = vcvt.s32.f32 %v1233
    %v1241 = vmul.f32 %v1240, %v1238
    %v1242 = vxor.u32 %v1241, 2147483648
    %v1243 = vsel %vm1160, %v1242, %v1241
    %v1244 = vsub.s32 4, %v1220
    %v1245 = vsel %vm1160, %v1244, %v1220
    %v1246 = vsel %vm1159, %v419, %v1243
    %v1247 = vsel %vm1159, 0, %v1245
    %v1248 = vcosq.f32.pop %v1246
    %v1249 = vsinq.f32.pop %v1246
    %vm1250 = vweird.f32 %v419
    %v1251 = vadd.s32 %v1247, 3
    %v1252 = vand.u32 %v1251, 3
    %vm1253 = vcmp.lt.s32.totalorder %v1252, 2
    %vm1254 = vcmp.eq.s32.totalorder %v1252, 0
    %v1255 = vxor.u32 %v1249, 2147483648
    %v1256 = vsel %vm1254, %v1248, %v1255
    %vm1257 = vcmp.eq.s32.totalorder %v1252, 2
    %v1258 = vxor.u32 %v1248, 2147483648
    %v1259 = vsel %vm1257, %v1258, %v1249
    %v1260 = vsel %vm1253, %v1256, %v1259
    %v1261 = vsel %vm1250, nan, %v1260
    %v1262 = vand.u32 2147483647, %v488
    %vm1263 = vcmp.le.f32.partialorder %v1262, 0.7853982
    %vm1264 = vcmp.lt.s32.totalorder %v488, 0
    %v1265 = vand.u32 %v488, 2139095040
    %v1266 = vshrl.u32 %v1265, 23
    %v1267 = vsub.s32 %v1266, 127
    %v1268 = vand.u32 2147483647, %v488
    %v1269 = vand.u32 %v1268, 8388607
    %v1270 = vor.u32 %v1269, 8388608
    %v1271 = vsub.s32 0, %v1270
    %v1272 = vadd.s32 %v1267, 1
    %vm1273 = vcmp.gt.s32.totalorder %v1272, 0
    %v1274 = vsel %vm1273, %v1272, 0
    %v1275 = vshrl.u32 %v1274, 5
    %v1276 = vand.u32 %v1274, 31
    %v1277 = vsub.s32 32, %v1276
    %v1278 = vshrl.u32 683565275, %v1277
    %v1279 = vshll.u32 683565275, %v1276
    %v1280 = vshrl.u32 2475754826, %v1277
    %v1281 = vor.u32 %v1279, %v1280
    %v1282 = vshll.u32 2475754826, %v1276
    %v1283 = vshrl.u32 2131351028, %v1277
    %v1284 = vor.u32 %v1282, %v1283
    %v1285 = vshll.u32 2131351028, %v1276
    %v1286 = vshrl.u32 2102212464, %v1277
    %v1287 = vor.u32 %v1285, %v1286
    %v1288 = vshll.u32 2102212464, %v1276
    %v1289 = vshrl.u32 920167782, %v1277
    %v1290 = vor.u32 %v1288, %v1289
    %v1291 = vshll.u32 920167782, %v1276
    %v1292 = vshrl.u32 1326507024, %v1277
    %v1293 = vor.u32 %v1291, %v1292
    %vm1294 = vcmp.lt.s32.totalorder %v1275, 1
    %vm1295 = vcmp.lt.s32.totalorder %v1275, 2
    %vm1296 = vcmp.lt.s32.totalorder %v1275, 3
    %vm1297 = vcmp.lt.s32.totalorder %v1275, 4
    %v1298 = vsel %vm1294, %v1278, %v1281
    %v1299 = vsel %vm1297, %v1287, 2102212464
    %v1300 = vsel %vm1296, %v1284, %v1299
    %v1301 = vsel %vm1295, %v1298, %v1300
    %v1302 = vsel %vm1294, %v1281, %v1284
    %v1303 = vsel %vm1297, %v1290, 920167782
    %v1304 = vsel %vm1296, %v1287, %v1303
    %v1305 = vsel %vm1295, %v1302, %v1304
    %v1306 = vsel %vm1294, %v1284, %v1287
    %v1307 = vsel %vm1297, %v1293, 1326507024
    %v1308 = vsel %vm1296, %v1290, %v1307
    %v1309 = vsel %vm1295, %v1306, %v1308
    %v1310 = vshll.u32 %v1270, 8
    %v1311 = vmul.u32.u64.compose %v1310, %v1309
    %v1312 = vextract.low.u32 %v1311
    %v1313 = vextract.high.u32 %v1311
    %v1314 = vmul.u32.u64.compose %v1310, %v1305
    %v1315 = vextract.low.u32 %v1314
    %v1316 = vextract.high.u32 %v1314
    %v1317 = vmul.u32 %v1310, %v1301
    %v1318 = vadd.s32 %v1313, %v1315
    %vm1319 = vc.u32 %v1313, %v1315
    %v1320 = vadd.s32 %v1316, 1
    %v1321 = vsel %vm1319, %v1320, %v1316
    %v1322 = vadd.s32 %v1317, %v1321
    %v1323 = vadd.s32 %v1322, 536870912
    %v1324 = vshrl.u32 %v1323, 30
    %v1325 = vshll.u32 %v1324, 30
    %v1326 = vsub.s32 %v1322, %v1325
    %vm1327 = vcmp.lt.s32.totalorder %v1326, 0
    %v1328 = vsub.s32 0, %v1326
    %v1329 = vsel %vm1327, %v1328, %v1326
    %v1330 = vclz %v1329
    %v1331 = vsub.s32 %v1330, 2
    %vm1332 = vcmp.gt.s32.totalorder 0, %v1331
    %v1333 = vsel %vm1332, 0, %v1331
    %v1334 = vsub.s32 32, %v1333
    %v1335 = vshll.u32 %v1326, %v1333
    %v1336 = vshrl.u32 %v1318, %v1334
    %v1337 = vor.u32 %v1335, %v1336
    %v1338 = vsub.s32 4294967266, %v1333
    %v1339 = vadd.s32 %v1338, 127
    %v1340 = vshll.u32 %v1339, 23
    %v1341 = vor.u32 4788187, %v1340
    %v1342 = vand.u32 2147483647, %v1341
    %v1344 = vcvt.s32.f32 %v1337
    %v1345 = vmul.f32 %v1344, %v1342
    %v1346 = vxor.u32 %v1345, 2147483648
    %v1347 = vsel %vm1264, %v1346, %v1345
    %v1348 = vsub.s32 4, %v1324
    %v1349 = vsel %vm1264, %v1348, %v1324
    %v1350 = vsel %vm1263, %v488, %v1347
    %v1351 = vsel %vm1263, 0, %v1349
    %v1352 = vcosq.f32.pop %v1350
    %v1353 = vsinq.f32.pop %v1350
    %vm1354 = vweird.f32 %v488
    %v1355 = vadd.s32 %v1351, 3
    %v1356 = vand.u32 %v1355, 3
    %vm1357 = vcmp.lt.s32.totalorder %v1356, 2
    %vm1358 = vcmp.eq.s32.totalorder %v1356, 0
    %v1359 = vxor.u32 %v1353, 2147483648
    %v1360 = vsel %vm1358, %v1352, %v1359
    %vm1361 = vcmp.eq.s32.totalorder %v1356, 2
    %v1362 = vxor.u32 %v1352, 2147483648
    %v1363 = vsel %vm1361, %v1362, %v1353
    %v1364 = vsel %vm1357, %v1360, %v1363
    %v1365 = vsel %vm1354, nan, %v1364
    %v1366 = vand.u32 2147483647, %v490
    %vm1367 = vcmp.le.f32.partialorder %v1366, 0.7853982
    %vm1368 = vcmp.lt.s32.totalorder %v490, 0
    %v1369 = vand.u32 %v490, 2139095040
    %v1370 = vshrl.u32 %v1369, 23
    %v1371 = vsub.s32 %v1370, 127
    %v1372 = vand.u32 2147483647, %v490
    %v1373 = vand.u32 %v1372, 8388607
    %v1374 = vor.u32 %v1373, 8388608
    %v1375 = vsub.s32 0, %v1374
    %v1376 = vadd.s32 %v1371, 1
    %vm1377 = vcmp.gt.s32.totalorder %v1376, 0
    %v1378 = vsel %vm1377, %v1376, 0
    %v1379 = vshrl.u32 %v1378, 5
    %v1380 = vand.u32 %v1378, 31
    %v1381 = vsub.s32 32, %v1380
    %v1382 = vshrl.u32 683565275, %v1381
    %v1383 = vshll.u32 683565275, %v1380
    %v1384 = vshrl.u32 2475754826, %v1381
    %v1385 = vor.u32 %v1383, %v1384
    %v1386 = vshll.u32 2475754826, %v1380
    %v1387 = vshrl.u32 2131351028, %v1381
    %v1388 = vor.u32 %v1386, %v1387
    %v1389 = vshll.u32 2131351028, %v1380
    %v1390 = vshrl.u32 2102212464, %v1381
    %v1391 = vor.u32 %v1389, %v1390
    %v1392 = vshll.u32 2102212464, %v1380
    %v1393 = vshrl.u32 920167782, %v1381
    %v1394 = vor.u32 %v1392, %v1393
    %v1395 = vshll.u32 920167782, %v1380
    %v1396 = vshrl.u32 1326507024, %v1381
    %v1397 = vor.u32 %v1395, %v1396
    %vm1398 = vcmp.lt.s32.totalorder %v1379, 1
    %vm1399 = vcmp.lt.s32.totalorder %v1379, 2
    %vm1400 = vcmp.lt.s32.totalorder %v1379, 3
    %vm1401 = vcmp.lt.s32.totalorder %v1379, 4
    %v1402 = vsel %vm1398, %v1382, %v1385
    %v1403 = vsel %vm1401, %v1391, 2102212464
    %v1404 = vsel %vm1400, %v1388, %v1403
    %v1405 = vsel %vm1399, %v1402, %v1404
    %v1406 = vsel %vm1398, %v1385, %v1388
    %v1407 = vsel %vm1401, %v1394, 920167782
    %v1408 = vsel %vm1400, %v1391, %v1407
    %v1409 = vsel %vm1399, %v1406, %v1408
    %v1410 = vsel %vm1398, %v1388, %v1391
    %v1411 = vsel %vm1401, %v1397, 1326507024
    %v1412 = vsel %vm1400, %v1394, %v1411
    %v1413 = vsel %vm1399, %v1410, %v1412
    %v1414 = vshll.u32 %v1374, 8
    %v1415 = vmul.u32.u64.compose %v1414, %v1413
    %v1416 = vextract.low.u32 %v1415
    %v1417 = vextract.high.u32 %v1415
    %v1418 = vmul.u32.u64.compose %v1414, %v1409
    %v1419 = vextract.low.u32 %v1418
    %v1420 = vextract.high.u32 %v1418
    %v1421 = vmul.u32 %v1414, %v1405
    %v1422 = vadd.s32 %v1417, %v1419
    %vm1423 = vc.u32 %v1417, %v1419
    %v1424 = vadd.s32 %v1420, 1
    %v1425 = vsel %vm1423, %v1424, %v1420
    %v1426 = vadd.s32 %v1421, %v1425
    %v1427 = vadd.s32 %v1426, 536870912
    %v1428 = vshrl.u32 %v1427, 30
    %v1429 = vshll.u32 %v1428, 30
    %v1430 = vsub.s32 %v1426, %v1429
    %vm1431 = vcmp.lt.s32.totalorder %v1430, 0
    %v1432 = vsub.s32 0, %v1430
    %v1433 = vsel %vm1431, %v1432, %v1430
    %v1434 = vclz %v1433
    %v1435 = vsub.s32 %v1434, 2
    %vm1436 = vcmp.gt.s32.totalorder 0, %v1435
    %v1437 = vsel %vm1436, 0, %v1435
    %v1438 = vsub.s32 32, %v1437
    %v1439 = vshll.u32 %v1430, %v1437
    %v1440 = vshrl.u32 %v1422, %v1438
    %v1441 = vor.u32 %v1439, %v1440
    %v1442 = vsub.s32 4294967266, %v1437
    %v1443 = vadd.s32 %v1442, 127
    %v1444 = vshll.u32 %v1443, 23
    %v1445 = vor.u32 4788187, %v1444
    %v1446 = vand.u32 2147483647, %v1445
    %v1448 = vcvt.s32.f32 %v1441
    %v1449 = vmul.f32 %v1448, %v1446
    %v1450 = vxor.u32 %v1449, 2147483648
    %v1451 = vsel %vm1368, %v1450, %v1449
    %v1452 = vsub.s32 4, %v1428
    %v1453 = vsel %vm1368, %v1452, %v1428
    %v1454 = vsel %vm1367, %v490, %v1451
    %v1455 = vsel %vm1367, 0, %v1453
    %v1456 = vcosq.f32.pop %v1454
    %v1457 = vsinq.f32.pop %v1454
    %vm1458 = vweird.f32 %v490
    %v1459 = vadd.s32 %v1455, 3
    %v1460 = vand.u32 %v1459, 3
    %vm1461 = vcmp.lt.s32.totalorder %v1460, 2
    %vm1462 = vcmp.eq.s32.totalorder %v1460, 0
    %v1463 = vxor.u32 %v1457, 2147483648
    %v1464 = vsel %vm1462, %v1456, %v1463
    %vm1465 = vcmp.eq.s32.totalorder %v1460, 2
    %v1466 = vxor.u32 %v1456, 2147483648
    %v1467 = vsel %vm1465, %v1466, %v1457
    %v1468 = vsel %vm1461, %v1464, %v1467
    %v1469 = vsel %vm1458, nan, %v1468
    %v1470 = vand.u32 2147483647, %v559
    %vm1471 = vcmp.le.f32.partialorder %v1470, 0.7853982
    %vm1472 = vcmp.lt.s32.totalorder %v559, 0
    %v1473 = vand.u32 %v559, 2139095040
    %v1474 = vshrl.u32 %v1473, 23
    %v1475 = vsub.s32 %v1474, 127
    %v1476 = vand.u32 2147483647, %v559
    %v1477 = vand.u32 %v1476, 8388607
    %v1478 = vor.u32 %v1477, 8388608
    %v1479 = vsub.s32 0, %v1478
    %v1480 = vadd.s32 %v1475, 1
    %vm1481 = vcmp.gt.s32.totalorder %v1480, 0
    %v1482 = vsel %vm1481, %v1480, 0
    %v1483 = vshrl.u32 %v1482, 5
    %v1484 = vand.u32 %v1482, 31
    %v1485 = vsub.s32 32, %v1484
    %v1486 = vshrl.u32 683565275, %v1485
    %v1487 = vshll.u32 683565275, %v1484
    %v1488 = vshrl.u32 2475754826, %v1485
    %v1489 = vor.u32 %v1487, %v1488
    %v1490 = vshll.u32 2475754826, %v1484
    %v1491 = vshrl.u32 2131351028, %v1485
    %v1492 = vor.u32 %v1490, %v1491
    %v1493 = vshll.u32 2131351028, %v1484
    %v1494 = vshrl.u32 2102212464, %v1485
    %v1495 = vor.u32 %v1493, %v1494
    %v1496 = vshll.u32 2102212464, %v1484
    %v1497 = vshrl.u32 920167782, %v1485
    %v1498 = vor.u32 %v1496, %v1497
    %v1499 = vshll.u32 920167782, %v1484
    %v1500 = vshrl.u32 1326507024, %v1485
    %v1501 = vor.u32 %v1499, %v1500
    %vm1502 = vcmp.lt.s32.totalorder %v1483, 1
    %vm1503 = vcmp.lt.s32.totalorder %v1483, 2
    %vm1504 = vcmp.lt.s32.totalorder %v1483, 3
    %vm1505 = vcmp.lt.s32.totalorder %v1483, 4
    %v1506 = vsel %vm1502, %v1486, %v1489
    %v1507 = vsel %vm1505, %v1495, 2102212464
    %v1508 = vsel %vm1504, %v1492, %v1507
    %v1509 = vsel %vm1503, %v1506, %v1508
    %v1510 = vsel %vm1502, %v1489, %v1492
    %v1511 = vsel %vm1505, %v1498, 920167782
    %v1512 = vsel %vm1504, %v1495, %v1511
    %v1513 = vsel %vm1503, %v1510, %v1512
    %v1514 = vsel %vm1502, %v1492, %v1495
    %v1515 = vsel %vm1505, %v1501, 1326507024
    %v1516 = vsel %vm1504, %v1498, %v1515
    %v1517 = vsel %vm1503, %v1514, %v1516
    %v1518 = vshll.u32 %v1478, 8
    %v1519 = vmul.u32.u64.compose %v1518, %v1517
    %v1520 = vextract.low.u32 %v1519
    %v1521 = vextract.high.u32 %v1519
    %v1522 = vmul.u32.u64.compose %v1518, %v1513
    %v1523 = vextract.low.u32 %v1522
    %v1524 = vextract.high.u32 %v1522
    %v1525 = vmul.u32 %v1518, %v1509
    %v1526 = vadd.s32 %v1521, %v1523
    %vm1527 = vc.u32 %v1521, %v1523
    %v1528 = vadd.s32 %v1524, 1
    %v1529 = vsel %vm1527, %v1528, %v1524
    %v1530 = vadd.s32 %v1525, %v1529
    %v1531 = vadd.s32 %v1530, 536870912
    %v1532 = vshrl.u32 %v1531, 30
    %v1533 = vshll.u32 %v1532, 30
    %v1534 = vsub.s32 %v1530, %v1533
    %vm1535 = vcmp.lt.s32.totalorder %v1534, 0
    %v1536 = vsub.s32 0, %v1534
    %v1537 = vsel %vm1535, %v1536, %v1534
    %v1538 = vclz %v1537
    %v1539 = vsub.s32 %v1538, 2
    %vm1540 = vcmp.gt.s32.totalorder 0, %v1539
    %v1541 = vsel %vm1540, 0, %v1539
    %v1542 = vsub.s32 32, %v1541
    %v1543 = vshll.u32 %v1534, %v1541
    %v1544 = vshrl.u32 %v1526, %v1542
    %v1545 = vor.u32 %v1543, %v1544
    %v1546 = vsub.s32 4294967266, %v1541
    %v1547 = vadd.s32 %v1546, 127
    %v1548 = vshll.u32 %v1547, 23
    %v1549 = vor.u32 4788187, %v1548
    %v1550 = vand.u32 2147483647, %v1549
    %v1552 = vcvt.s32.f32 %v1545
    %v1553 = vmul.f32 %v1552, %v1550
    %v1554 = vxor.u32 %v1553, 2147483648
    %v1555 = vsel %vm1472, %v1554, %v1553
    %v1556 = vsub.s32 4, %v1532
    %v1557 = vsel %vm1472, %v1556, %v1532
    %v1558 = vsel %vm1471, %v559, %v1555
    %v1559 = vsel %vm1471, 0, %v1557
    %v1560 = vcosq.f32.pop %v1558
    %v1561 = vsinq.f32.pop %v1558
    %vm1562 = vweird.f32 %v559
    %v1563 = vadd.s32 %v1559, 3
    %v1564 = vand.u32 %v1563, 3
    %vm1565 = vcmp.lt.s32.totalorder %v1564, 2
    %vm1566 = vcmp.eq.s32.totalorder %v1564, 0
    %v1567 = vxor.u32 %v1561, 2147483648
    %v1568 = vsel %vm1566, %v1560, %v1567
    %vm1569 = vcmp.eq.s32.totalorder %v1564, 2
    %v1570 = vxor.u32 %v1560, 2147483648
    %v1571 = vsel %vm1569, %v1570, %v1561
    %v1572 = vsel %vm1565, %v1568, %v1571
    %v1573 = vsel %vm1562, nan, %v1572
    %v1574 = vand.u32 2147483647, %v561
    %vm1575 = vcmp.le.f32.partialorder %v1574, 0.7853982
    %vm1576 = vcmp.lt.s32.totalorder %v561, 0
    %v1577 = vand.u32 %v561, 2139095040
    %v1578 = vshrl.u32 %v1577, 23
    %v1579 = vsub.s32 %v1578, 127
    %v1580 = vand.u32 2147483647, %v561
    %v1581 = vand.u32 %v1580, 8388607
    %v1582 = vor.u32 %v1581, 8388608
    %v1583 = vsub.s32 0, %v1582
    %v1584 = vadd.s32 %v1579, 1
    %vm1585 = vcmp.gt.s32.totalorder %v1584, 0
    %v1586 = vsel %vm1585, %v1584, 0
    %v1587 = vshrl.u32 %v1586, 5
    %v1588 = vand.u32 %v1586, 31
    %v1589 = vsub.s32 32, %v1588
    %v1590 = vshrl.u32 683565275, %v1589
    %v1591 = vshll.u32 683565275, %v1588
    %v1592 = vshrl.u32 2475754826, %v1589
    %v1593 = vor.u32 %v1591, %v1592
    %v1594 = vshll.u32 2475754826, %v1588
    %v1595 = vshrl.u32 2131351028, %v1589
    %v1596 = vor.u32 %v1594, %v1595
    %v1597 = vshll.u32 2131351028, %v1588
    %v1598 = vshrl.u32 2102212464, %v1589
    %v1599 = vor.u32 %v1597, %v1598
    %v1600 = vshll.u32 2102212464, %v1588
    %v1601 = vshrl.u32 920167782, %v1589
    %v1602 = vor.u32 %v1600, %v1601
    %v1603 = vshll.u32 920167782, %v1588
    %v1604 = vshrl.u32 1326507024, %v1589
    %v1605 = vor.u32 %v1603, %v1604
    %vm1606 = vcmp.lt.s32.totalorder %v1587, 1
    %vm1607 = vcmp.lt.s32.totalorder %v1587, 2
    %vm1608 = vcmp.lt.s32.totalorder %v1587, 3
    %vm1609 = vcmp.lt.s32.totalorder %v1587, 4
    %v1610 = vsel %vm1606, %v1590, %v1593
    %v1611 = vsel %vm1609, %v1599, 2102212464
    %v1612 = vsel %vm1608, %v1596, %v1611
    %v1613 = vsel %vm1607, %v1610, %v1612
    %v1614 = vsel %vm1606, %v1593, %v1596
    %v1615 = vsel %vm1609, %v1602, 920167782
    %v1616 = vsel %vm1608, %v1599, %v1615
    %v1617 = vsel %vm1607, %v1614, %v1616
    %v1618 = vsel %vm1606, %v1596, %v1599
    %v1619 = vsel %vm1609, %v1605, 1326507024
    %v1620 = vsel %vm1608, %v1602, %v1619
    %v1621 = vsel %vm1607, %v1618, %v1620
    %v1622 = vshll.u32 %v1582, 8
    %v1623 = vmul.u32.u64.compose %v1622, %v1621
    %v1624 = vextract.low.u32 %v1623
    %v1625 = vextract.high.u32 %v1623
    %v1626 = vmul.u32.u64.compose %v1622, %v1617
    %v1627 = vextract.low.u32 %v1626
    %v1628 = vextract.high.u32 %v1626
    %v1629 = vmul.u32 %v1622, %v1613
    %v1630 = vadd.s32 %v1625, %v1627
    %vm1631 = vc.u32 %v1625, %v1627
    %v1632 = vadd.s32 %v1628, 1
    %v1633 = vsel %vm1631, %v1632, %v1628
    %v1634 = vadd.s32 %v1629, %v1633
    %v1635 = vadd.s32 %v1634, 536870912
    %v1636 = vshrl.u32 %v1635, 30
    %v1637 = vshll.u32 %v1636, 30
    %v1638 = vsub.s32 %v1634, %v1637
    %vm1639 = vcmp.lt.s32.totalorder %v1638, 0
    %v1640 = vsub.s32 0, %v1638
    %v1641 = vsel %vm1639, %v1640, %v1638
    %v1642 = vclz %v1641
    %v1643 = vsub.s32 %v1642, 2
    %vm1644 = vcmp.gt.s32.totalorder 0, %v1643
    %v1645 = vsel %vm1644, 0, %v1643
    %v1646 = vsub.s32 32, %v1645
    %v1647 = vshll.u32 %v1638, %v1645
    %v1648 = vshrl.u32 %v1630, %v1646
    %v1649 = vor.u32 %v1647, %v1648
    %v1650 = vsub.s32 4294967266, %v1645
    %v1651 = vadd.s32 %v1650, 127
    %v1652 = vshll.u32 %v1651, 23
    %v1653 = vor.u32 4788187, %v1652
    %v1654 = vand.u32 2147483647, %v1653
    %v1656 = vcvt.s32.f32 %v1649
    %v1657 = vmul.f32 %v1656, %v1654
    %v1658 = vxor.u32 %v1657, 2147483648
    %v1659 = vsel %vm1576, %v1658, %v1657
    %v1660 = vsub.s32 4, %v1636
    %v1661 = vsel %vm1576, %v1660, %v1636
    %v1662 = vsel %vm1575, %v561, %v1659
    %v1663 = vsel %vm1575, 0, %v1661
    %v1664 = vcosq.f32.pop %v1662
    %v1665 = vsinq.f32.pop %v1662
    %vm1666 = vweird.f32 %v561
    %v1667 = vadd.s32 %v1663, 3
    %v1668 = vand.u32 %v1667, 3
    %vm1669 = vcmp.lt.s32.totalorder %v1668, 2
    %vm1670 = vcmp.eq.s32.totalorder %v1668, 0
    %v1671 = vxor.u32 %v1665, 2147483648
    %v1672 = vsel %vm1670, %v1664, %v1671
    %vm1673 = vcmp.eq.s32.totalorder %v1668, 2
    %v1674 = vxor.u32 %v1664, 2147483648
    %v1675 = vsel %vm1673, %v1674, %v1665
    %v1676 = vsel %vm1669, %v1672, %v1675
    %v1677 = vsel %vm1666, nan, %v1676
    %v1678 = vand.u32 2147483647, %v630
    %vm1679 = vcmp.le.f32.partialorder %v1678, 0.7853982
    %vm1680 = vcmp.lt.s32.totalorder %v630, 0
    %v1681 = vand.u32 %v630, 2139095040
    %v1682 = vshrl.u32 %v1681, 23
    %v1683 = vsub.s32 %v1682, 127
    %v1684 = vand.u32 2147483647, %v630
    %v1685 = vand.u32 %v1684, 8388607
    %v1686 = vor.u32 %v1685, 8388608
    %v1687 = vsub.s32 0, %v1686
    %v1688 = vadd.s32 %v1683, 1
    %vm1689 = vcmp.gt.s32.totalorder %v1688, 0
    %v1690 = vsel %vm1689, %v1688, 0
    %v1691 = vshrl.u32 %v1690, 5
    %v1692 = vand.u32 %v1690, 31
    %v1693 = vsub.s32 32, %v1692
    %v1694 = vshrl.u32 683565275, %v1693
    %v1695 = vshll.u32 683565275, %v1692
    %v1696 = vshrl.u32 2475754826, %v1693
    %v1697 = vor.u32 %v1695, %v1696
    %v1698 = vshll.u32 2475754826, %v1692
    %v1699 = vshrl.u32 2131351028, %v1693
    %v1700 = vor.u32 %v1698, %v1699
    %v1701 = vshll.u32 2131351028, %v1692
    %v1702 = vshrl.u32 2102212464, %v1693
    %v1703 = vor.u32 %v1701, %v1702
    %v1704 = vshll.u32 2102212464, %v1692
    %v1705 = vshrl.u32 920167782, %v1693
    %v1706 = vor.u32 %v1704, %v1705
    %v1707 = vshll.u32 920167782, %v1692
    %v1708 = vshrl.u32 1326507024, %v1693
    %v1709 = vor.u32 %v1707, %v1708
    %vm1710 = vcmp.lt.s32.totalorder %v1691, 1
    %vm1711 = vcmp.lt.s32.totalorder %v1691, 2
    %vm1712 = vcmp.lt.s32.totalorder %v1691, 3
    %vm1713 = vcmp.lt.s32.totalorder %v1691, 4
    %v1714 = vsel %vm1710, %v1694, %v1697
    %v1715 = vsel %vm1713, %v1703, 2102212464
    %v1716 = vsel %vm1712, %v1700, %v1715
    %v1717 = vsel %vm1711, %v1714, %v1716
    %v1718 = vsel %vm1710, %v1697, %v1700
    %v1719 = vsel %vm1713, %v1706, 920167782
    %v1720 = vsel %vm1712, %v1703, %v1719
    %v1721 = vsel %vm1711, %v1718, %v1720
    %v1722 = vsel %vm1710, %v1700, %v1703
    %v1723 = vsel %vm1713, %v1709, 1326507024
    %v1724 = vsel %vm1712, %v1706, %v1723
    %v1725 = vsel %vm1711, %v1722, %v1724
    %v1726 = vshll.u32 %v1686, 8
    %v1727 = vmul.u32.u64.compose %v1726, %v1725
    %v1728 = vextract.low.u32 %v1727
    %v1729 = vextract.high.u32 %v1727
    %v1730 = vmul.u32.u64.compose %v1726, %v1721
    %v1731 = vextract.low.u32 %v1730
    %v1732 = vextract.high.u32 %v1730
    %v1733 = vmul.u32 %v1726, %v1717
    %v1734 = vadd.s32 %v1729, %v1731
    %vm1735 = vc.u32 %v1729, %v1731
    %v1736 = vadd.s32 %v1732, 1
    %v1737 = vsel %vm1735, %v1736, %v1732
    %v1738 = vadd.s32 %v1733, %v1737
    %v1739 = vadd.s32 %v1738, 536870912
    %v1740 = vshrl.u32 %v1739, 30
    %v1741 = vshll.u32 %v1740, 30
    %v1742 = vsub.s32 %v1738, %v1741
    %vm1743 = vcmp.lt.s32.totalorder %v1742, 0
    %v1744 = vsub.s32 0, %v1742
    %v1745 = vsel %vm1743, %v1744, %v1742
    %v1746 = vclz %v1745
    %v1747 = vsub.s32 %v1746, 2
    %vm1748 = vcmp.gt.s32.totalorder 0, %v1747
    %v1749 = vsel %vm1748, 0, %v1747
    %v1750 = vsub.s32 32, %v1749
    %v1751 = vshll.u32 %v1742, %v1749
    %v1752 = vshrl.u32 %v1734, %v1750
    %v1753 = vor.u32 %v1751, %v1752
    %v1754 = vsub.s32 4294967266, %v1749
    %v1755 = vadd.s32 %v1754, 127
    %v1756 = vshll.u32 %v1755, 23
    %v1757 = vor.u32 4788187, %v1756
    %v1758 = vand.u32 2147483647, %v1757
    %v1760 = vcvt.s32.f32 %v1753
    %v1761 = vmul.f32 %v1760, %v1758
    %v1762 = vxor.u32 %v1761, 2147483648
    %v1763 = vsel %vm1680, %v1762, %v1761
    %v1764 = vsub.s32 4, %v1740
    %v1765 = vsel %vm1680, %v1764, %v1740
    %v1766 = vsel %vm1679, %v630, %v1763
    %v1767 = vsel %vm1679, 0, %v1765
    %v1768 = vcosq.f32.pop %v1766
    %v1769 = vsinq.f32.pop %v1766
    %vm1770 = vweird.f32 %v630
    %v1771 = vadd.s32 %v1767, 3
    %v1772 = vand.u32 %v1771, 3
    %vm1773 = vcmp.lt.s32.totalorder %v1772, 2
    %vm1774 = vcmp.eq.s32.totalorder %v1772, 0
    %v1775 = vxor.u32 %v1769, 2147483648
    %v1776 = vsel %vm1774, %v1768, %v1775
    %vm1777 = vcmp.eq.s32.totalorder %v1772, 2
    %v1778 = vxor.u32 %v1768, 2147483648
    %v1779 = vsel %vm1777, %v1778, %v1769
    %v1780 = vsel %vm1773, %v1776, %v1779
    %v1781 = vsel %vm1770, nan, %v1780
    %v1782 = vand.u32 2147483647, %v632
    %vm1783 = vcmp.le.f32.partialorder %v1782, 0.7853982
    %vm1784 = vcmp.lt.s32.totalorder %v632, 0
    %v1785 = vand.u32 %v632, 2139095040
    %v1786 = vshrl.u32 %v1785, 23
    %v1787 = vsub.s32 %v1786, 127
    %v1788 = vand.u32 2147483647, %v632
    %v1789 = vand.u32 %v1788, 8388607
    %v1790 = vor.u32 %v1789, 8388608
    %v1791 = vsub.s32 0, %v1790
    %v1792 = vadd.s32 %v1787, 1
    %vm1793 = vcmp.gt.s32.totalorder %v1792, 0
    %v1794 = vsel %vm1793, %v1792, 0
    %v1795 = vshrl.u32 %v1794, 5
    %v1796 = vand.u32 %v1794, 31
    %v1797 = vsub.s32 32, %v1796
    %v1798 = vshrl.u32 683565275, %v1797
    %v1799 = vshll.u32 683565275, %v1796
    %v1800 = vshrl.u32 2475754826, %v1797
    %v1801 = vor.u32 %v1799, %v1800
    %v1802 = vshll.u32 2475754826, %v1796
    %v1803 = vshrl.u32 2131351028, %v1797
    %v1804 = vor.u32 %v1802, %v1803
    %v1805 = vshll.u32 2131351028, %v1796
    %v1806 = vshrl.u32 2102212464, %v1797
    %v1807 = vor.u32 %v1805, %v1806
    %v1808 = vshll.u32 2102212464, %v1796
    %v1809 = vshrl.u32 920167782, %v1797
    %v1810 = vor.u32 %v1808, %v1809
    %v1811 = vshll.u32 920167782, %v1796
    %v1812 = vshrl.u32 1326507024, %v1797
    %v1813 = vor.u32 %v1811, %v1812
    %vm1814 = vcmp.lt.s32.totalorder %v1795, 1
    %vm1815 = vcmp.lt.s32.totalorder %v1795, 2
    %vm1816 = vcmp.lt.s32.totalorder %v1795, 3
    %vm1817 = vcmp.lt.s32.totalorder %v1795, 4
    %v1818 = vsel %vm1814, %v1798, %v1801
    %v1819 = vsel %vm1817, %v1807, 2102212464
    %v1820 = vsel %vm1816, %v1804, %v1819
    %v1821 = vsel %vm1815, %v1818, %v1820
    %v1822 = vsel %vm1814, %v1801, %v1804
    %v1823 = vsel %vm1817, %v1810, 920167782
    %v1824 = vsel %vm1816, %v1807, %v1823
    %v1825 = vsel %vm1815, %v1822, %v1824
    %v1826 = vsel %vm1814, %v1804, %v1807
    %v1827 = vsel %vm1817, %v1813, 1326507024
    %v1828 = vsel %vm1816, %v1810, %v1827
    %v1829 = vsel %vm1815, %v1826, %v1828
    %v1830 = vshll.u32 %v1790, 8
    %v1831 = vmul.u32.u64.compose %v1830, %v1829
    %v1832 = vextract.low.u32 %v1831
    %v1833 = vextract.high.u32 %v1831
    %v1834 = vmul.u32.u64.compose %v1830, %v1825
    %v1835 = vextract.low.u32 %v1834
    %v1836 = vextract.high.u32 %v1834
    %v1837 = vmul.u32 %v1830, %v1821
    %v1838 = vadd.s32 %v1833, %v1835
    %vm1839 = vc.u32 %v1833, %v1835
    %v1840 = vadd.s32 %v1836, 1
    %v1841 = vsel %vm1839, %v1840, %v1836
    %v1842 = vadd.s32 %v1837, %v1841
    %v1843 = vadd.s32 %v1842, 536870912
    %v1844 = vshrl.u32 %v1843, 30
    %v1845 = vshll.u32 %v1844, 30
    %v1846 = vsub.s32 %v1842, %v1845
    %vm1847 = vcmp.lt.s32.totalorder %v1846, 0
    %v1848 = vsub.s32 0, %v1846
    %v1849 = vsel %vm1847, %v1848, %v1846
    %v1850 = vclz %v1849
    %v1851 = vsub.s32 %v1850, 2
    %vm1852 = vcmp.gt.s32.totalorder 0, %v1851
    %v1853 = vsel %vm1852, 0, %v1851
    %v1854 = vsub.s32 32, %v1853
    %v1855 = vshll.u32 %v1846, %v1853
    %v1856 = vshrl.u32 %v1838, %v1854
    %v1857 = vor.u32 %v1855, %v1856
    %v1858 = vsub.s32 4294967266, %v1853
    %v1859 = vadd.s32 %v1858, 127
    %v1860 = vshll.u32 %v1859, 23
    %v1861 = vor.u32 4788187, %v1860
    %v1862 = vand.u32 2147483647, %v1861
    %v1864 = vcvt.s32.f32 %v1857
    %v1865 = vmul.f32 %v1864, %v1862
    %v1866 = vxor.u32 %v1865, 2147483648
    %v1867 = vsel %vm1784, %v1866, %v1865
    %v1868 = vsub.s32 4, %v1844
    %v1869 = vsel %vm1784, %v1868, %v1844
    %v1870 = vsel %vm1783, %v632, %v1867
    %v1871 = vsel %vm1783, 0, %v1869
    %v1872 = vcosq.f32.pop %v1870
    %v1873 = vsinq.f32.pop %v1870
    %vm1874 = vweird.f32 %v632
    %v1875 = vadd.s32 %v1871, 3
    %v1876 = vand.u32 %v1875, 3
    %vm1877 = vcmp.lt.s32.totalorder %v1876, 2
    %vm1878 = vcmp.eq.s32.totalorder %v1876, 0
    %v1879 = vxor.u32 %v1873, 2147483648
    %v1880 = vsel %vm1878, %v1872, %v1879
    %vm1881 = vcmp.eq.s32.totalorder %v1876, 2
    %v1882 = vxor.u32 %v1872, 2147483648
    %v1883 = vsel %vm1881, %v1882, %v1873
    %v1884 = vsel %vm1877, %v1880, %v1883
    %v1885 = vsel %vm1874, nan, %v1884
    %v1886 = vand.u32 2147483647, %v701
    %vm1887 = vcmp.le.f32.partialorder %v1886, 0.7853982
    %vm1888 = vcmp.lt.s32.totalorder %v701, 0
    %v1889 = vand.u32 %v701, 2139095040
    %v1890 = vshrl.u32 %v1889, 23
    %v1891 = vsub.s32 %v1890, 127
    %v1892 = vand.u32 2147483647, %v701
    %v1893 = vand.u32 %v1892, 8388607
    %v1894 = vor.u32 %v1893, 8388608
    %v1895 = vsub.s32 0, %v1894
    %v1896 = vadd.s32 %v1891, 1
    %vm1897 = vcmp.gt.s32.totalorder %v1896, 0
    %v1898 = vsel %vm1897, %v1896, 0
    %v1899 = vshrl.u32 %v1898, 5
    %v1900 = vand.u32 %v1898, 31
    %v1901 = vsub.s32 32, %v1900
    %v1902 = vshrl.u32 683565275, %v1901
    %v1903 = vshll.u32 683565275, %v1900
    %v1904 = vshrl.u32 2475754826, %v1901
    %v1905 = vor.u32 %v1903, %v1904
    %v1906 = vshll.u32 2475754826, %v1900
    %v1907 = vshrl.u32 2131351028, %v1901
    %v1908 = vor.u32 %v1906, %v1907
    %v1909 = vshll.u32 2131351028, %v1900
    %v1910 = vshrl.u32 2102212464, %v1901
    %v1911 = vor.u32 %v1909, %v1910
    %v1912 = vshll.u32 2102212464, %v1900
    %v1913 = vshrl.u32 920167782, %v1901
    %v1914 = vor.u32 %v1912, %v1913
    %v1915 = vshll.u32 920167782, %v1900
    %v1916 = vshrl.u32 1326507024, %v1901
    %v1917 = vor.u32 %v1915, %v1916
    %vm1918 = vcmp.lt.s32.totalorder %v1899, 1
    %vm1919 = vcmp.lt.s32.totalorder %v1899, 2
    %vm1920 = vcmp.lt.s32.totalorder %v1899, 3
    %vm1921 = vcmp.lt.s32.totalorder %v1899, 4
    %v1922 = vsel %vm1918, %v1902, %v1905
    %v1923 = vsel %vm1921, %v1911, 2102212464
    %v1924 = vsel %vm1920, %v1908, %v1923
    %v1925 = vsel %vm1919, %v1922, %v1924
    %v1926 = vsel %vm1918, %v1905, %v1908
    %v1927 = vsel %vm1921, %v1914, 920167782
    %v1928 = vsel %vm1920, %v1911, %v1927
    %v1929 = vsel %vm1919, %v1926, %v1928
    %v1930 = vsel %vm1918, %v1908, %v1911
    %v1931 = vsel %vm1921, %v1917, 1326507024
    %v1932 = vsel %vm1920, %v1914, %v1931
    %v1933 = vsel %vm1919, %v1930, %v1932
    %v1934 = vshll.u32 %v1894, 8
    %v1935 = vmul.u32.u64.compose %v1934, %v1933
    %v1936 = vextract.low.u32 %v1935
    %v1937 = vextract.high.u32 %v1935
    %v1938 = vmul.u32.u64.compose %v1934, %v1929
    %v1939 = vextract.low.u32 %v1938
    %v1940 = vextract.high.u32 %v1938
    %v1941 = vmul.u32 %v1934, %v1925
    %v1942 = vadd.s32 %v1937, %v1939
    %vm1943 = vc.u32 %v1937, %v1939
    %v1944 = vadd.s32 %v1940, 1
    %v1945 = vsel %vm1943, %v1944, %v1940
    %v1946 = vadd.s32 %v1941, %v1945
    %v1947 = vadd.s32 %v1946, 536870912
    %v1948 = vshrl.u32 %v1947, 30
    %v1949 = vshll.u32 %v1948, 30
    %v1950 = vsub.s32 %v1946, %v1949
    %vm1951 = vcmp.lt.s32.totalorder %v1950, 0
    %v1952 = vsub.s32 0, %v1950
    %v1953 = vsel %vm1951, %v1952, %v1950
    %v1954 = vclz %v1953
    %v1955 = vsub.s32 %v1954, 2
    %vm1956 = vcmp.gt.s32.totalorder 0, %v1955
    %v1957 = vsel %vm1956, 0, %v1955
    %v1958 = vsub.s32 32, %v1957
    %v1959 = vshll.u32 %v1950, %v1957
    %v1960 = vshrl.u32 %v1942, %v1958
    %v1961 = vor.u32 %v1959, %v1960
    %v1962 = vsub.s32 4294967266, %v1957
    %v1963 = vadd.s32 %v1962, 127
    %v1964 = vshll.u32 %v1963, 23
    %v1965 = vor.u32 4788187, %v1964
    %v1966 = vand.u32 2147483647, %v1965
    %v1968 = vcvt.s32.f32 %v1961
    %v1969 = vmul.f32 %v1968, %v1966
    %v1970 = vxor.u32 %v1969, 2147483648
    %v1971 = vsel %vm1888, %v1970, %v1969
    %v1972 = vsub.s32 4, %v1948
    %v1973 = vsel %vm1888, %v1972, %v1948
    %v1974 = vsel %vm1887, %v701, %v1971
    %v1975 = vsel %vm1887, 0, %v1973
    %v1976 = vcosq.f32.pop %v1974
    %v1977 = vsinq.f32.pop %v1974
    %vm1978 = vweird.f32 %v701
    %v1979 = vadd.s32 %v1975, 3
    %v1980 = vand.u32 %v1979, 3
    %vm1981 = vcmp.lt.s32.totalorder %v1980, 2
    %vm1982 = vcmp.eq.s32.totalorder %v1980, 0
    %v1983 = vxor.u32 %v1977, 2147483648
    %v1984 = vsel %vm1982, %v1976, %v1983
    %vm1985 = vcmp.eq.s32.totalorder %v1980, 2
    %v1986 = vxor.u32 %v1976, 2147483648
    %v1987 = vsel %vm1985, %v1986, %v1977
    %v1988 = vsel %vm1981, %v1984, %v1987
    %v1989 = vsel %vm1978, nan, %v1988
    %v1990 = vand.u32 2147483647, %v703
    %vm1991 = vcmp.le.f32.partialorder %v1990, 0.7853982
    %vm1992 = vcmp.lt.s32.totalorder %v703, 0
    %v1993 = vand.u32 %v703, 2139095040
    %v1994 = vshrl.u32 %v1993, 23
    %v1995 = vsub.s32 %v1994, 127
    %v1996 = vand.u32 2147483647, %v703
    %v1997 = vand.u32 %v1996, 8388607
    %v1998 = vor.u32 %v1997, 8388608
    %v1999 = vsub.s32 0, %v1998
    %v2000 = vadd.s32 %v1995, 1
    %vm2001 = vcmp.gt.s32.totalorder %v2000, 0
    %v2002 = vsel %vm2001, %v2000, 0
    %v2003 = vshrl.u32 %v2002, 5
    %v2004 = vand.u32 %v2002, 31
    %v2005 = vsub.s32 32, %v2004
    %v2006 = vshrl.u32 683565275, %v2005
    %v2007 = vshll.u32 683565275, %v2004
    %v2008 = vshrl.u32 2475754826, %v2005
    %v2009 = vor.u32 %v2007, %v2008
    %v2010 = vshll.u32 2475754826, %v2004
    %v2011 = vshrl.u32 2131351028, %v2005
    %v2012 = vor.u32 %v2010, %v2011
    %v2013 = vshll.u32 2131351028, %v2004
    %v2014 = vshrl.u32 2102212464, %v2005
    %v2015 = vor.u32 %v2013, %v2014
    %v2016 = vshll.u32 2102212464, %v2004
    %v2017 = vshrl.u32 920167782, %v2005
    %v2018 = vor.u32 %v2016, %v2017
    %v2019 = vshll.u32 920167782, %v2004
    %v2020 = vshrl.u32 1326507024, %v2005
    %v2021 = vor.u32 %v2019, %v2020
    %vm2022 = vcmp.lt.s32.totalorder %v2003, 1
    %vm2023 = vcmp.lt.s32.totalorder %v2003, 2
    %vm2024 = vcmp.lt.s32.totalorder %v2003, 3
    %vm2025 = vcmp.lt.s32.totalorder %v2003, 4
    %v2026 = vsel %vm2022, %v2006, %v2009
    %v2027 = vsel %vm2025, %v2015, 2102212464
    %v2028 = vsel %vm2024, %v2012, %v2027
    %v2029 = vsel %vm2023, %v2026, %v2028
    %v2030 = vsel %vm2022, %v2009, %v2012
    %v2031 = vsel %vm2025, %v2018, 920167782
    %v2032 = vsel %vm2024, %v2015, %v2031
    %v2033 = vsel %vm2023, %v2030, %v2032
    %v2034 = vsel %vm2022, %v2012, %v2015
    %v2035 = vsel %vm2025, %v2021, 1326507024
    %v2036 = vsel %vm2024, %v2018, %v2035
    %v2037 = vsel %vm2023, %v2034, %v2036
    %v2038 = vshll.u32 %v1998, 8
    %v2039 = vmul.u32.u64.compose %v2038, %v2037
    %v2040 = vextract.low.u32 %v2039
    %v2041 = vextract.high.u32 %v2039
    %v2042 = vmul.u32.u64.compose %v2038, %v2033
    %v2043 = vextract.low.u32 %v2042
    %v2044 = vextract.high.u32 %v2042
    %v2045 = vmul.u32 %v2038, %v2029
    %v2046 = vadd.s32 %v2041, %v2043
    %vm2047 = vc.u32 %v2041, %v2043
    %v2048 = vadd.s32 %v2044, 1
    %v2049 = vsel %vm2047, %v2048, %v2044
    %v2050 = vadd.s32 %v2045, %v2049
    %v2051 = vadd.s32 %v2050, 536870912
    %v2052 = vshrl.u32 %v2051, 30
    %v2053 = vshll.u32 %v2052, 30
    %v2054 = vsub.s32 %v2050, %v2053
    %vm2055 = vcmp.lt.s32.totalorder %v2054, 0
    %v2056 = vsub.s32 0, %v2054
    %v2057 = vsel %vm2055, %v2056, %v2054
    %v2058 = vclz %v2057
    %v2059 = vsub.s32 %v2058, 2
    %vm2060 = vcmp.gt.s32.totalorder 0, %v2059
    %v2061 = vsel %vm2060, 0, %v2059
    %v2062 = vsub.s32 32, %v2061
    %v2063 = vshll.u32 %v2054, %v2061
    %v2064 = vshrl.u32 %v2046, %v2062
    %v2065 = vor.u32 %v2063, %v2064
    %v2066 = vsub.s32 4294967266, %v2061
    %v2067 = vadd.s32 %v2066, 127
    %v2068 = vshll.u32 %v2067, 23
    %v2069 = vor.u32 4788187, %v2068
    %v2070 = vand.u32 2147483647, %v2069
    %v2072 = vcvt.s32.f32 %v2065
    %v2073 = vmul.f32 %v2072, %v2070
    %v2074 = vxor.u32 %v2073, 2147483648
    %v2075 = vsel %vm1992, %v2074, %v2073
    %v2076 = vsub.s32 4, %v2052
    %v2077 = vsel %vm1992, %v2076, %v2052
    %v2078 = vsel %vm1991, %v703, %v2075
    %v2079 = vsel %vm1991, 0, %v2077
    %v2080 = vcosq.f32.pop %v2078
    %v2081 = vsinq.f32.pop %v2078
    %vm2082 = vweird.f32 %v703
    %v2083 = vadd.s32 %v2079, 3
    %v2084 = vand.u32 %v2083, 3
    %vm2085 = vcmp.lt.s32.totalorder %v2084, 2
    %vm2086 = vcmp.eq.s32.totalorder %v2084, 0
    %v2087 = vxor.u32 %v2081, 2147483648
    %v2088 = vsel %vm2086, %v2080, %v2087
    %vm2089 = vcmp.eq.s32.totalorder %v2084, 2
    %v2090 = vxor.u32 %v2080, 2147483648
    %v2091 = vsel %vm2089, %v2090, %v2081
    %v2092 = vsel %vm2085, %v2088, %v2091
    %v2093 = vsel %vm2082, nan, %v2092
    %v2094 = vand.u32 2147483647, %v772
    %vm2095 = vcmp.le.f32.partialorder %v2094, 0.7853982
    %vm2096 = vcmp.lt.s32.totalorder %v772, 0
    %v2097 = vand.u32 %v772, 2139095040
    %v2098 = vshrl.u32 %v2097, 23
    %v2099 = vsub.s32 %v2098, 127
    %v2100 = vand.u32 2147483647, %v772
    %v2101 = vand.u32 %v2100, 8388607
    %v2102 = vor.u32 %v2101, 8388608
    %v2103 = vsub.s32 0, %v2102
    %v2104 = vadd.s32 %v2099, 1
    %vm2105 = vcmp.gt.s32.totalorder %v2104, 0
    %v2106 = vsel %vm2105, %v2104, 0
    %v2107 = vshrl.u32 %v2106, 5
    %v2108 = vand.u32 %v2106, 31
    %v2109 = vsub.s32 32, %v2108
    %v2110 = vshrl.u32 683565275, %v2109
    %v2111 = vshll.u32 683565275, %v2108
    %v2112 = vshrl.u32 2475754826, %v2109
    %v2113 = vor.u32 %v2111, %v2112
    %v2114 = vshll.u32 2475754826, %v2108
    %v2115 = vshrl.u32 2131351028, %v2109
    %v2116 = vor.u32 %v2114, %v2115
    %v2117 = vshll.u32 2131351028, %v2108
    %v2118 = vshrl.u32 2102212464, %v2109
    %v2119 = vor.u32 %v2117, %v2118
    %v2120 = vshll.u32 2102212464, %v2108
    %v2121 = vshrl.u32 920167782, %v2109
    %v2122 = vor.u32 %v2120, %v2121
    %v2123 = vshll.u32 920167782, %v2108
    %v2124 = vshrl.u32 1326507024, %v2109
    %v2125 = vor.u32 %v2123, %v2124
    %vm2126 = vcmp.lt.s32.totalorder %v2107, 1
    %vm2127 = vcmp.lt.s32.totalorder %v2107, 2
    %vm2128 = vcmp.lt.s32.totalorder %v2107, 3
    %vm2129 = vcmp.lt.s32.totalorder %v2107, 4
    %v2130 = vsel %vm2126, %v2110, %v2113
    %v2131 = vsel %vm2129, %v2119, 2102212464
    %v2132 = vsel %vm2128, %v2116, %v2131
    %v2133 = vsel %vm2127, %v2130, %v2132
    %v2134 = vsel %vm2126, %v2113, %v2116
    %v2135 = vsel %vm2129, %v2122, 920167782
    %v2136 = vsel %vm2128, %v2119, %v2135
    %v2137 = vsel %vm2127, %v2134, %v2136
    %v2138 = vsel %vm2126, %v2116, %v2119
    %v2139 = vsel %vm2129, %v2125, 1326507024
    %v2140 = vsel %vm2128, %v2122, %v2139
    %v2141 = vsel %vm2127, %v2138, %v2140
    %v2142 = vshll.u32 %v2102, 8
    %v2143 = vmul.u32.u64.compose %v2142, %v2141
    %v2144 = vextract.low.u32 %v2143
    %v2145 = vextract.high.u32 %v2143
    %v2146 = vmul.u32.u64.compose %v2142, %v2137
    %v2147 = vextract.low.u32 %v2146
    %v2148 = vextract.high.u32 %v2146
    %v2149 = vmul.u32 %v2142, %v2133
    %v2150 = vadd.s32 %v2145, %v2147
    %vm2151 = vc.u32 %v2145, %v2147
    %v2152 = vadd.s32 %v2148, 1
    %v2153 = vsel %vm2151, %v2152, %v2148
    %v2154 = vadd.s32 %v2149, %v2153
    %v2155 = vadd.s32 %v2154, 536870912
    %v2156 = vshrl.u32 %v2155, 30
    %v2157 = vshll.u32 %v2156, 30
    %v2158 = vsub.s32 %v2154, %v2157
    %vm2159 = vcmp.lt.s32.totalorder %v2158, 0
    %v2160 = vsub.s32 0, %v2158
    %v2161 = vsel %vm2159, %v2160, %v2158
    %v2162 = vclz %v2161
    %v2163 = vsub.s32 %v2162, 2
    %vm2164 = vcmp.gt.s32.totalorder 0, %v2163
    %v2165 = vsel %vm2164, 0, %v2163
    %v2166 = vsub.s32 32, %v2165
    %v2167 = vshll.u32 %v2158, %v2165
    %v2168 = vshrl.u32 %v2150, %v2166
    %v2169 = vor.u32 %v2167, %v2168
    %v2170 = vsub.s32 4294967266, %v2165
    %v2171 = vadd.s32 %v2170, 127
    %v2172 = vshll.u32 %v2171, 23
    %v2173 = vor.u32 4788187, %v2172
    %v2174 = vand.u32 2147483647, %v2173
    %v2176 = vcvt.s32.f32 %v2169
    %v2177 = vmul.f32 %v2176, %v2174
    %v2178 = vxor.u32 %v2177, 2147483648
    %v2179 = vsel %vm2096, %v2178, %v2177
    %v2180 = vsub.s32 4, %v2156
    %v2181 = vsel %vm2096, %v2180, %v2156
    %v2182 = vsel %vm2095, %v772, %v2179
    %v2183 = vsel %vm2095, 0, %v2181
    %v2184 = vcosq.f32.pop %v2182
    %v2185 = vsinq.f32.pop %v2182
    %vm2186 = vweird.f32 %v772
    %v2187 = vadd.s32 %v2183, 3
    %v2188 = vand.u32 %v2187, 3
    %vm2189 = vcmp.lt.s32.totalorder %v2188, 2
    %vm2190 = vcmp.eq.s32.totalorder %v2188, 0
    %v2191 = vxor.u32 %v2185, 2147483648
    %v2192 = vsel %vm2190, %v2184, %v2191
    %vm2193 = vcmp.eq.s32.totalorder %v2188, 2
    %v2194 = vxor.u32 %v2184, 2147483648
    %v2195 = vsel %vm2193, %v2194, %v2185
    %v2196 = vsel %vm2189, %v2192, %v2195
    %v2197 = vsel %vm2186, nan, %v2196
    %v2198 = vand.u32 2147483647, %v774
    %vm2199 = vcmp.le.f32.partialorder %v2198, 0.7853982
    %vm2200 = vcmp.lt.s32.totalorder %v774, 0
    %v2201 = vand.u32 %v774, 2139095040
    %v2202 = vshrl.u32 %v2201, 23
    %v2203 = vsub.s32 %v2202, 127
    %v2204 = vand.u32 2147483647, %v774
    %v2205 = vand.u32 %v2204, 8388607
    %v2206 = vor.u32 %v2205, 8388608
    %v2207 = vsub.s32 0, %v2206
    %v2208 = vadd.s32 %v2203, 1
    %vm2209 = vcmp.gt.s32.totalorder %v2208, 0
    %v2210 = vsel %vm2209, %v2208, 0
    %v2211 = vshrl.u32 %v2210, 5
    %v2212 = vand.u32 %v2210, 31
    %v2213 = vsub.s32 32, %v2212
    %v2214 = vshrl.u32 683565275, %v2213
    %v2215 = vshll.u32 683565275, %v2212
    %v2216 = vshrl.u32 2475754826, %v2213
    %v2217 = vor.u32 %v2215, %v2216
    %v2218 = vshll.u32 2475754826, %v2212
    %v2219 = vshrl.u32 2131351028, %v2213
    %v2220 = vor.u32 %v2218, %v2219
    %v2221 = vshll.u32 2131351028, %v2212
    %v2222 = vshrl.u32 2102212464, %v2213
    %v2223 = vor.u32 %v2221, %v2222
    %v2224 = vshll.u32 2102212464, %v2212
    %v2225 = vshrl.u32 920167782, %v2213
    %v2226 = vor.u32 %v2224, %v2225
    %v2227 = vshll.u32 920167782, %v2212
    %v2228 = vshrl.u32 1326507024, %v2213
    %v2229 = vor.u32 %v2227, %v2228
    %vm2230 = vcmp.lt.s32.totalorder %v2211, 1
    %vm2231 = vcmp.lt.s32.totalorder %v2211, 2
    %vm2232 = vcmp.lt.s32.totalorder %v2211, 3
    %vm2233 = vcmp.lt.s32.totalorder %v2211, 4
    %v2234 = vsel %vm2230, %v2214, %v2217
    %v2235 = vsel %vm2233, %v2223, 2102212464
    %v2236 = vsel %vm2232, %v2220, %v2235
    %v2237 = vsel %vm2231, %v2234, %v2236
    %v2238 = vsel %vm2230, %v2217, %v2220
    %v2239 = vsel %vm2233, %v2226, 920167782
    %v2240 = vsel %vm2232, %v2223, %v2239
    %v2241 = vsel %vm2231, %v2238, %v2240
    %v2242 = vsel %vm2230, %v2220, %v2223
    %v2243 = vsel %vm2233, %v2229, 1326507024
    %v2244 = vsel %vm2232, %v2226, %v2243
    %v2245 = vsel %vm2231, %v2242, %v2244
    %v2246 = vshll.u32 %v2206, 8
    %v2247 = vmul.u32.u64.compose %v2246, %v2245
    %v2248 = vextract.low.u32 %v2247
    %v2249 = vextract.high.u32 %v2247
    %v2250 = vmul.u32.u64.compose %v2246, %v2241
    %v2251 = vextract.low.u32 %v2250
    %v2252 = vextract.high.u32 %v2250
    %v2253 = vmul.u32 %v2246, %v2237
    %v2254 = vadd.s32 %v2249, %v2251
    %vm2255 = vc.u32 %v2249, %v2251
    %v2256 = vadd.s32 %v2252, 1
    %v2257 = vsel %vm2255, %v2256, %v2252
    %v2258 = vadd.s32 %v2253, %v2257
    %v2259 = vadd.s32 %v2258, 536870912
    %v2260 = vshrl.u32 %v2259, 30
    %v2261 = vshll.u32 %v2260, 30
    %v2262 = vsub.s32 %v2258, %v2261
    %vm2263 = vcmp.lt.s32.totalorder %v2262, 0
    %v2264 = vsub.s32 0, %v2262
    %v2265 = vsel %vm2263, %v2264, %v2262
    %v2266 = vclz %v2265
    %v2267 = vsub.s32 %v2266, 2
    %vm2268 = vcmp.gt.s32.totalorder 0, %v2267
    %v2269 = vsel %vm2268, 0, %v2267
    %v2270 = vsub.s32 32, %v2269
    %v2271 = vshll.u32 %v2262, %v2269
    %v2272 = vshrl.u32 %v2254, %v2270
    %v2273 = vor.u32 %v2271, %v2272
    %v2274 = vsub.s32 4294967266, %v2269
    %v2275 = vadd.s32 %v2274, 127
    %v2276 = vshll.u32 %v2275, 23
    %v2277 = vor.u32 4788187, %v2276
    %v2278 = vand.u32 2147483647, %v2277
    %v2280 = vcvt.s32.f32 %v2273
    %v2281 = vmul.f32 %v2280, %v2278
    %v2282 = vxor.u32 %v2281, 2147483648
    %v2283 = vsel %vm2200, %v2282, %v2281
    %v2284 = vsub.s32 4, %v2260
    %v2285 = vsel %vm2200, %v2284, %v2260
    %v2286 = vsel %vm2199, %v774, %v2283
    %v2287 = vsel %vm2199, 0, %v2285
    %v2288 = vcosq.f32.pop %v2286
    %v2289 = vsinq.f32.pop %v2286
    %vm2290 = vweird.f32 %v774
    %v2291 = vadd.s32 %v2287, 3
    %v2292 = vand.u32 %v2291, 3
    %vm2293 = vcmp.lt.s32.totalorder %v2292, 2
    %vm2294 = vcmp.eq.s32.totalorder %v2292, 0
    %v2295 = vxor.u32 %v2289, 2147483648
    %v2296 = vsel %vm2294, %v2288, %v2295
    %vm2297 = vcmp.eq.s32.totalorder %v2292, 2
    %v2298 = vxor.u32 %v2288, 2147483648
    %v2299 = vsel %vm2297, %v2298, %v2289
    %v2300 = vsel %vm2293, %v2296, %v2299
    %v2301 = vsel %vm2290, nan, %v2300
    %v2302 = vand.u32 2147483647, %v843
    %vm2303 = vcmp.le.f32.partialorder %v2302, 0.7853982
    %vm2304 = vcmp.lt.s32.totalorder %v843, 0
    %v2305 = vand.u32 %v843, 2139095040
    %v2306 = vshrl.u32 %v2305, 23
    %v2307 = vsub.s32 %v2306, 127
    %v2308 = vand.u32 2147483647, %v843
    %v2309 = vand.u32 %v2308, 8388607
    %v2310 = vor.u32 %v2309, 8388608
    %v2311 = vsub.s32 0, %v2310
    %v2312 = vadd.s32 %v2307, 1
    %vm2313 = vcmp.gt.s32.totalorder %v2312, 0
    %v2314 = vsel %vm2313, %v2312, 0
    %v2315 = vshrl.u32 %v2314, 5
    %v2316 = vand.u32 %v2314, 31
    %v2317 = vsub.s32 32, %v2316
    %v2318 = vshrl.u32 683565275, %v2317
    %v2319 = vshll.u32 683565275, %v2316
    %v2320 = vshrl.u32 2475754826, %v2317
    %v2321 = vor.u32 %v2319, %v2320
    %v2322 = vshll.u32 2475754826, %v2316
    %v2323 = vshrl.u32 2131351028, %v2317
    %v2324 = vor.u32 %v2322, %v2323
    %v2325 = vshll.u32 2131351028, %v2316
    %v2326 = vshrl.u32 2102212464, %v2317
    %v2327 = vor.u32 %v2325, %v2326
    %v2328 = vshll.u32 2102212464, %v2316
    %v2329 = vshrl.u32 920167782, %v2317
    %v2330 = vor.u32 %v2328, %v2329
    %v2331 = vshll.u32 920167782, %v2316
    %v2332 = vshrl.u32 1326507024, %v2317
    %v2333 = vor.u32 %v2331, %v2332
    %vm2334 = vcmp.lt.s32.totalorder %v2315, 1
    %vm2335 = vcmp.lt.s32.totalorder %v2315, 2
    %vm2336 = vcmp.lt.s32.totalorder %v2315, 3
    %vm2337 = vcmp.lt.s32.totalorder %v2315, 4
    %v2338 = vsel %vm2334, %v2318, %v2321
    %v2339 = vsel %vm2337, %v2327, 2102212464
    %v2340 = vsel %vm2336, %v2324, %v2339
    %v2341 = vsel %vm2335, %v2338, %v2340
    %v2342 = vsel %vm2334, %v2321, %v2324
    %v2343 = vsel %vm2337, %v2330, 920167782
    %v2344 = vsel %vm2336, %v2327, %v2343
    %v2345 = vsel %vm2335, %v2342, %v2344
    %v2346 = vsel %vm2334, %v2324, %v2327
    %v2347 = vsel %vm2337, %v2333, 1326507024
    %v2348 = vsel %vm2336, %v2330, %v2347
    %v2349 = vsel %vm2335, %v2346, %v2348
    %v2350 = vshll.u32 %v2310, 8
    %v2351 = vmul.u32.u64.compose %v2350, %v2349
    %v2352 = vextract.low.u32 %v2351
    %v2353 = vextract.high.u32 %v2351
    %v2354 = vmul.u32.u64.compose %v2350, %v2345
    %v2355 = vextract.low.u32 %v2354
    %v2356 = vextract.high.u32 %v2354
    %v2357 = vmul.u32 %v2350, %v2341
    %v2358 = vadd.s32 %v2353, %v2355
    %vm2359 = vc.u32 %v2353, %v2355
    %v2360 = vadd.s32 %v2356, 1
    %v2361 = vsel %vm2359, %v2360, %v2356
    %v2362 = vadd.s32 %v2357, %v2361
    %v2363 = vadd.s32 %v2362, 536870912
    %v2364 = vshrl.u32 %v2363, 30
    %v2365 = vshll.u32 %v2364, 30
    %v2366 = vsub.s32 %v2362, %v2365
    %vm2367 = vcmp.lt.s32.totalorder %v2366, 0
    %v2368 = vsub.s32 0, %v2366
    %v2369 = vsel %vm2367, %v2368, %v2366
    %v2370 = vclz %v2369
    %v2371 = vsub.s32 %v2370, 2
    %vm2372 = vcmp.gt.s32.totalorder 0, %v2371
    %v2373 = vsel %vm2372, 0, %v2371
    %v2374 = vsub.s32 32, %v2373
    %v2375 = vshll.u32 %v2366, %v2373
    %v2376 = vshrl.u32 %v2358, %v2374
    %v2377 = vor.u32 %v2375, %v2376
    %v2378 = vsub.s32 4294967266, %v2373
    %v2379 = vadd.s32 %v2378, 127
    %v2380 = vshll.u32 %v2379, 23
    %v2381 = vor.u32 4788187, %v2380
    %v2382 = vand.u32 2147483647, %v2381
    %v2384 = vcvt.s32.f32 %v2377
    %v2385 = vmul.f32 %v2384, %v2382
    %v2386 = vxor.u32 %v2385, 2147483648
    %v2387 = vsel %vm2304, %v2386, %v2385
    %v2388 = vsub.s32 4, %v2364
    %v2389 = vsel %vm2304, %v2388, %v2364
    %v2390 = vsel %vm2303, %v843, %v2387
    %v2391 = vsel %vm2303, 0, %v2389
    %v2392 = vcosq.f32.pop %v2390
    %v2393 = vsinq.f32.pop %v2390
    %vm2394 = vweird.f32 %v843
    %v2395 = vadd.s32 %v2391, 3
    %v2396 = vand.u32 %v2395, 3
    %vm2397 = vcmp.lt.s32.totalorder %v2396, 2
    %vm2398 = vcmp.eq.s32.totalorder %v2396, 0
    %v2399 = vxor.u32 %v2393, 2147483648
    %v2400 = vsel %vm2398, %v2392, %v2399
    %vm2401 = vcmp.eq.s32.totalorder %v2396, 2
    %v2402 = vxor.u32 %v2392, 2147483648
    %v2403 = vsel %vm2401, %v2402, %v2393
    %v2404 = vsel %vm2397, %v2400, %v2403
    %v2405 = vsel %vm2394, nan, %v2404
    %2406 = vst [vmem:[#allocation7] sm:$0xff] %v949
    %2407 = vst [vmem:[#allocation7 + $0x8] sm:$0xff] %v1053
    %2408 = vst [vmem:[#allocation7 + $0x10] sm:$0xff] %v1157
    %2409 = vst [vmem:[#allocation7 + $0x18] sm:$0xff] %v1261
    %2410 = vst [vmem:[#allocation7 + $0x20] sm:$0xff] %v1365
    %2411 = vst [vmem:[#allocation7 + $0x28] sm:$0xff] %v1469
    %2412 = vst [vmem:[#allocation7 + $0x30] sm:$0xff] %v1573
    %2413 = vst [vmem:[#allocation7 + $0x38] sm:$0xff] %v1677
    %2414 = vst [vmem:[#allocation7 + $0x40] sm:$0xff] %v1781
    %2415 = vst [vmem:[#allocation7 + $0x48] sm:$0xff] %v1885
    %2416 = vst [vmem:[#allocation7 + $0x50] sm:$0xff] %v1989
    %2417 = vst [vmem:[#allocation7 + $0x58] sm:$0xff] %v2093
    %2418 = vst [vmem:[#allocation7 + $0x60] sm:$0xff] %v2197
    %2419 = vst [vmem:[#allocation7 + $0x68] sm:$0xff] %v2301
    %2420 = vst [vmem:[#allocation7 + $0x70] sm:$0xff] %v2405
    // Predicated region
    $region18: #{tpu_custom_call.1} parent=1 // pred_check
      _
    $region19: #{tpu_custom_call.1} parent=1 // pred_check_branch
      %2422 = sbr.rel (0) target = $region21
    $region20: #{tpu_custom_call.1} parent=1 // pred_region
      %s2424 = ssub.s32 1920, 1920
      %2425 = vsyncadd [#allocation4], %s2424
      %s2427 = sshll.u32 [#allocation7], 4
      %s2428 = int_to_ptr.vmem [resolvable:$true] %s2427
      %2430 = dma.vmem_to_hbm [thread:$0]  %s2428, 1920, %s2, [#allocation4]
    $region21: #{tpu_custom_call.1} parent=1 // pred_fallthru
      _
    // Predicated region
    $region22: #{tpu_custom_call.1} parent=1 // pred_check
      _
    $region23: #{tpu_custom_call.1} parent=1 // pred_check_branch
      %2432 = sbr.rel (0) target = $region25
    $region24: #{tpu_custom_call.1} parent=1 // pred_region
      %2433 = dma.done [#allocation4], 1920
    $region25: #{tpu_custom_call.1} parent=1 // pred_fallthru
      _
    %2434 = vsyncpa [#allocation3], 1
    %2435 = vsyncpa [#allocation6], 1
    %2436 = vsyncpa [#allocation4], 1

</llo_original>
